<compile_context>
chip_gen: v7x
topology: tpu7x:2x2x1
jax: 0.10.0
libtpu: 0.0.40
codegen_flags: <defaults>
</compile_context>

<pallas_src>
import functools

import jax
import jax.numpy as jnp
from jax.experimental import pallas as pl
from jax.experimental.pallas import tpu as pltpu


def _link_kernel(
    src_ref, dst_ref,                 # (TE, 1) int32 edge endpoints (per tile)
    hdrug_ref, hprot_ref,             # (Nd_pad, H), (Np_pad, H) bf16 node tables (VMEM consts)
    ps_ref, pd_ref, bgp_ref,          # packed gate+bilinear panels (H, 3H) bf16 + bias row (1, 3H) f32
    w1s_ref, w1d_ref, b1_ref,         # mlp layer 1 (BN folded)
    w2_ref, b2_ref,                   # mlp layer 2 (BN folded)
    w3_ref,                           # output row (1, H) f32, fused reduce on the VPU
    bias_ref,                         # (1, 1) f32 in SMEM: b3 + b_bil
    out_ref,                          # (TE, 1) f32 scores
):
    f32, bf16 = jnp.float32, jnp.bfloat16
    H = w3_ref.shape[1]
    te = src_ref.shape[0]
    n_d = hdrug_ref.shape[0]
    n_p = hprot_ref.shape[0]

    # ---- in-kernel gather: exact one-hot matmul on the MXU -------------------
    eq_s = src_ref[...] == jax.lax.broadcasted_iota(jnp.int32, (te, n_d), 1)
    eq_d = dst_ref[...] == jax.lax.broadcasted_iota(jnp.int32, (te, n_p), 1)
    oh_s = jnp.where(eq_s, 1.0, 0.0).astype(bf16)                 # (TE, Nd)
    oh_d = jnp.where(eq_d, 1.0, 0.0).astype(bf16)                 # (TE, Np)
    hs_f = jnp.dot(oh_s, hdrug_ref[...], preferred_element_type=f32)   # (TE, H) f32 (exact bf16 values)
    hd_f = jnp.dot(oh_d, hprot_ref[...], preferred_element_type=f32)
    hs = hs_f.astype(bf16)
    hd = hd_f.astype(bf16)

    # ---- packed gate + bilinear (2 MXU matmuls) ------------------------------
    #   pre[:, :2H] = [hs, hd] @ Wg.T + b_gate      pre[:, 2H:] = hs @ W_bil
    pre = (jnp.dot(hs, ps_ref[...], preferred_element_type=f32)
           + jnp.dot(hd, pd_ref[...], preferred_element_type=f32)
           + bgp_ref[...])                                         # (TE, 3H) f32
    g = jax.nn.sigmoid(pre)             # EUP slot; the extra H lanes are unused filler

    hgs = g[:, :H] * hs_f                                          # gated src half
    hgd = g[:, H:2 * H] * hd_f                                     # gated dst half
    bilv = pre[:, 2 * H:] * hd_f                                   # (hs @ W_bil) * hd

    # ---- MLP layer 1 (BN folded) + ReLU --------------------------------------
    z = (jnp.dot(hgs.astype(bf16), w1s_ref[...], preferred_element_type=f32)
         + jnp.dot(hgd.astype(bf16), w1d_ref[...], preferred_element_type=f32)
         + b1_ref[...])
    z = jnp.maximum(z, 0.0)
    # [Dropout = identity in eval mode]

    # ---- MLP layer 2 (BN folded) + ReLU --------------------------------------
    z = jnp.dot(z.astype(bf16), w2_ref[...], preferred_element_type=f32) + b2_ref[...]
    z = jnp.maximum(z, 0.0)

    # ---- fused output: mlp score + bilinear score in one lane reduce ---------
    fused = z * w3_ref[...] + bilv
    out_ref[...] = jnp.sum(fused, axis=-1, keepdims=True) + bias_ref[0, 0]


def init_params(key, in_drug, in_prot, hidden):
    """Deterministic synthetic parameters with PyTorch-default-like uniform ranges."""
    ks = jax.random.split(key, 12)

    def lin_w(k, out_f, in_f):
        b = 1.0 / jnp.sqrt(in_f)
        return jax.random.uniform(k, (out_f, in_f), jnp.float32, -b, b)

    def lin_b(k, out_f, in_f):
        b = 1.0 / jnp.sqrt(in_f)
        return jax.random.uniform(k, (out_f,), jnp.float32, -b, b)

    H = hidden
    p = {}
    p["w_src"] = lin_w(ks[0], H, in_drug)                    # proj_src (no bias)
    p["w_dst"] = lin_w(ks[1], H, in_prot)                    # proj_dst (no bias)
    p["w_gate"] = lin_w(ks[2], 2 * H, 2 * H)
    p["b_gate"] = lin_b(ks[3], 2 * H, 2 * H)
    p["w1"] = lin_w(ks[4], H, 2 * H)
    p["b1"] = lin_b(ks[5], H, 2 * H)
    p["w2"] = lin_w(ks[6], H, H)
    p["b2"] = lin_b(ks[7], H, H)
    p["w3"] = lin_w(ks[8], 1, H)
    p["b3"] = lin_b(ks[9], 1, H)
    # BatchNorm1d (fresh init): gamma=1, beta=0, running_mean=0, running_var=1
    p["bn1"] = dict(gamma=jnp.ones((H,)), beta=jnp.zeros((H,)),
                    mean=jnp.zeros((H,)), var=jnp.ones((H,)))
    p["bn2"] = dict(gamma=jnp.ones((H,)), beta=jnp.zeros((H,)),
                    mean=jnp.zeros((H,)), var=jnp.ones((H,)))
    # nn.Bilinear(H, H, 1): weight (1, H, H), bias (1,)
    bb = 1.0 / jnp.sqrt(H)
    p["w_bil"] = jax.random.uniform(ks[10], (1, H, H), jnp.float32, -bb, bb)
    p["b_bil"] = jax.random.uniform(ks[11], (1,), jnp.float32, -bb, bb)
    return p


def _fold_bn(bn, eps=1e-5):
    scale = bn["gamma"] / jnp.sqrt(bn["var"] + eps)
    shift = bn["beta"] - bn["mean"] * scale
    return scale, shift


def _round_up(x, m):
    return (x + m - 1) // m * m


@functools.partial(jax.jit, static_argnames=("tile_e",))
def link_predictor_forward(x_drug, x_prot, edge_index, params, tile_e=2048):
    f32, bf16 = jnp.float32, jnp.bfloat16
    H = params["w_src"].shape[0]

    # Per-node projection done ONCE in plain XLA (tiny matmuls over num_nodes);
    # the kernel keeps the projected tables resident in VMEM and gathers rows
    # in-kernel, so per edge only 2 x int32 go through HBM on the input side.
    h_drug = (x_drug.astype(f32) @ params["w_src"].T.astype(f32)).astype(bf16)   # (N_drug, H)
    h_prot = (x_prot.astype(f32) @ params["w_dst"].T.astype(f32)).astype(bf16)   # (N_prot, H)

    n_drug, n_prot = h_drug.shape[0], h_prot.shape[0]
    nd_pad = max(8, _round_up(n_drug, 8))
    np_pad = max(8, _round_up(n_prot, 8))
    if max(nd_pad, np_pad) > 1024:
        # TODO(synk): manual DMA-gather path (pl.ANY + make_async_copy) for node
        # tables too large for the in-kernel one-hot gather.
        raise NotImplementedError("node tables too large for the one-hot VMEM gather")
    h_drug = jnp.pad(h_drug, ((0, nd_pad - n_drug), (0, 0)))
    h_prot = jnp.pad(h_prot, ((0, np_pad - n_prot), (0, 0)))

    src = edge_index[0].astype(jnp.int32).reshape(-1, 1)   # (E, 1)
    dst = edge_index[1].astype(jnp.int32).reshape(-1, 1)
    E = src.shape[0]

    # Tile size: big tiles amortize the per-grid-step overhead; cap at
    # ceil(E/2) rounded to the sublane so the "parallel" edge axis always has
    # >= 2 tiles for v7x's two TensorCores.  Per-tile VMEM at tile_e=2048,
    # H=32 is only a few MB (including the f32 intermediates), far under the
    # scoped-VMEM default on every generation, so no vmem_limit_bytes needed.
    tile_e = int(min(tile_e, max(8, _round_up((E + 1) // 2, 8))))
    n_tiles = (E + tile_e - 1) // tile_e
    e_pad = n_tiles * tile_e
    if e_pad != E:                       # pad indices (4 B/edge) with node 0; tail rows are sliced off
        src = jnp.pad(src, ((0, e_pad - E), (0, 0)))
        dst = jnp.pad(dst, ((0, e_pad - E), (0, 0)))

    # Fold BatchNorm (eval) into the adjacent linears.
    s1, sh1 = _fold_bn(params["bn1"])
    s2, sh2 = _fold_bn(params["bn2"])
    w1_f = params["w1"].T * s1[None, :]              # (2H, H)
    b1_f = params["b1"] * s1 + sh1
    w2_f = params["w2"].T * s2[None, :]              # (H, H)
    b2_f = params["b2"] * s2 + sh2

    # Pack gate quadrants + bilinear form into two (H, 3H) MXU panels:
    #   pre = hs @ [Wg.T[:H] | W_bil]  +  hd @ [Wg.T[H:] | 0]  + [b_gate | 0]
    wg_t = params["w_gate"].T                        # (2H, 2H)
    ps = jnp.concatenate([wg_t[:H, :], params["w_bil"][0]], axis=1).astype(bf16)          # (H, 3H)
    pd = jnp.concatenate([wg_t[H:, :], jnp.zeros((H, H), f32)], axis=1).astype(bf16)      # (H, 3H)
    bgp = jnp.concatenate([params["b_gate"], jnp.zeros((H,), f32)]).reshape(1, 3 * H).astype(f32)

    def row(v):                                      # per-channel vectors as (1, C) f32
        return v.reshape(1, -1).astype(f32)

    consts = [
        h_drug, h_prot,                              # node tables (VMEM-resident)
        ps, pd, bgp,                                 # packed gate + bilinear
        w1_f[:H].astype(bf16), w1_f[H:].astype(bf16), row(b1_f),
        w2_f.astype(bf16), row(b2_f),
        row(params["w3"][0]),                        # (1, H) f32 output row
    ]
    bias = (params["b3"] + params["b_bil"]).reshape(1, 1).astype(f32)   # scalar -> SMEM

    def const_spec(a):
        nd = a.ndim
        return pl.BlockSpec(a.shape, lambda i, _nd=nd: (0,) * _nd)

    idx_spec = pl.BlockSpec((tile_e, 1), lambda i: (i, 0))
    in_specs = ([idx_spec, idx_spec]
                + [const_spec(a) for a in consts]
                + [pl.BlockSpec(memory_space=pltpu.MemorySpace.SMEM)])

    out = pl.pallas_call(
        _link_kernel,
        out_shape=jax.ShapeDtypeStruct((e_pad, 1), f32),
        grid=(n_tiles,),
        in_specs=in_specs,
        out_specs=pl.BlockSpec((tile_e, 1), lambda i: (i, 0)),
        compiler_params=pltpu.CompilerParams(
            # "parallel" edge axis -> megacore sharding on v7x (>= 2 tiles
            # guaranteed above); harmless on single-TC v5e/v6e.
            dimension_semantics=("parallel",)
        ),
    )(src, dst, *consts, bias)

    return out[:E, 0]                                # (E,)


def _reference_forward(x_drug, x_prot, edge_index, params):
    """Pure-JAX f32 reference mirroring the PyTorch forward (eval mode)."""
    src, dst = edge_index[0], edge_index[1]
    h_src = jnp.take(x_drug, src, axis=0) @ params["w_src"].T
    h_dst = jnp.take(x_prot, dst, axis=0) @ params["w_dst"].T
    h_cat = jnp.concatenate([h_src, h_dst], axis=1)
    gate = jax.nn.sigmoid(h_cat @ params["w_gate"].T + params["b_gate"])
    h = gate * h_cat
    s1, sh1 = _fold_bn(params["bn1"])
    s2, sh2 = _fold_bn(params["bn2"])
    z = jnp.maximum((h @ params["w1"].T + params["b1"]) * s1 + sh1, 0.0)
    z = jnp.maximum((z @ params["w2"].T + params["b2"]) * s2 + sh2, 0.0)
    mlp_score = (z @ params["w3"].T + params["b3"])[:, 0]
    bil = jnp.einsum("eh,hk,ek->e", h_src, params["w_bil"][0], h_dst) + params["b_bil"][0]
    return mlp_score + bil


if __name__ == "__main__":
    key = jax.random.PRNGKey(0)
    k_xd, k_xp, k_src, k_dst, k_params = jax.random.split(key, 5)

    # Small deterministic problem: node feature tables + edge list.
    N_DRUG, N_PROT = 10, 12
    IN_DRUG, IN_PROT, HIDDEN = 16, 24, 32
    E = 130                                          # odd-ish size -> exercises index padding + 2 tiles

    x_drug = jax.random.normal(k_xd, (N_DRUG, IN_DRUG), jnp.float32)
    x_prot = jax.random.normal(k_xp, (N_PROT, IN_PROT), jnp.float32)
    edge_index = jnp.stack([
        jax.random.randint(k_src, (E,), 0, N_DRUG),
        jax.random.randint(k_dst, (E,), 0, N_PROT),
    ])                                               # (2, E)

    params = init_params(k_params, IN_DRUG, IN_PROT, HIDDEN)

    out = link_predictor_forward(x_drug, x_prot, edge_index, params)
    jax.block_until_ready(out)

    ref = _reference_forward(x_drug, x_prot, edge_index, params)
    assert out.shape == (E,)
    # bf16 MXU operands -> compare against the f32 reference with a bf16-scale tolerance.
    err = float(jnp.max(jnp.abs(out - ref)))
    scale = float(jnp.maximum(jnp.max(jnp.abs(ref)), 1.0))
    assert err <= 5e-2 * scale, f"mismatch vs JAX reference: max_err={err:.4g}, scale={scale:.4g}"

    print("KERNEL_OK")
</pallas_src>

<mosaic_0001>
module attributes {stable_mosaic.version = 11 : i64} {
  func.func @_link_kernel(%arg0: i32, %arg1: memref<72x1xi32, #tpu.memory_space<vmem>>, %arg2: memref<72x1xi32, #tpu.memory_space<vmem>>, %arg3: memref<16x32xbf16, #tpu.memory_space<vmem>>, %arg4: memref<16x32xbf16, #tpu.memory_space<vmem>>, %arg5: memref<32x96xbf16, #tpu.memory_space<vmem>>, %arg6: memref<32x96xbf16, #tpu.memory_space<vmem>>, %arg7: memref<1x96xf32, #tpu.memory_space<vmem>>, %arg8: memref<32x32xbf16, #tpu.memory_space<vmem>>, %arg9: memref<32x32xbf16, #tpu.memory_space<vmem>>, %arg10: memref<1x32xf32, #tpu.memory_space<vmem>>, %arg11: memref<32x32xbf16, #tpu.memory_space<vmem>>, %arg12: memref<1x32xf32, #tpu.memory_space<vmem>>, %arg13: memref<1x32xf32, #tpu.memory_space<vmem>>, %arg14: memref<1x1xf32, #tpu.memory_space<smem>>, %arg15: memref<72x1xf32, #tpu.memory_space<vmem>>) attributes {dimension_semantics = [#tpu.dimension_semantics<parallel>], iteration_bounds = array<i64: 2>, scalar_prefetch = 0 : i64, scratch_operands = 0 : i64, tpu.core_type = #tpu.core_type<tc>, window_params = [{transform_indices = @transform_0, window_bounds = array<i64: 72, 1>}, {transform_indices = @transform_1, window_bounds = array<i64: 72, 1>}, {pipeline_mode = #tpu.pipeline_mode<synchronous>, transform_indices = @transform_2, window_bounds = array<i64: 16, 32>}, {pipeline_mode = #tpu.pipeline_mode<synchronous>, transform_indices = @transform_3, window_bounds = array<i64: 16, 32>}, {pipeline_mode = #tpu.pipeline_mode<synchronous>, transform_indices = @transform_4, window_bounds = array<i64: 32, 96>}, {pipeline_mode = #tpu.pipeline_mode<synchronous>, transform_indices = @transform_5, window_bounds = array<i64: 32, 96>}, {pipeline_mode = #tpu.pipeline_mode<synchronous>, transform_indices = @transform_6, window_bounds = array<i64: 1, 96>}, {pipeline_mode = #tpu.pipeline_mode<synchronous>, transform_indices = @transform_7, window_bounds = array<i64: 32, 32>}, {pipeline_mode = #tpu.pipeline_mode<synchronous>, transform_indices = @transform_8, window_bounds = array<i64: 32, 32>}, {pipeline_mode = #tpu.pipeline_mode<synchronous>, transform_indices = @transform_9, window_bounds = array<i64: 1, 32>}, {pipeline_mode = #tpu.pipeline_mode<synchronous>, transform_indices = @transform_10, window_bounds = array<i64: 32, 32>}, {pipeline_mode = #tpu.pipeline_mode<synchronous>, transform_indices = @transform_11, window_bounds = array<i64: 1, 32>}, {pipeline_mode = #tpu.pipeline_mode<synchronous>, transform_indices = @transform_12, window_bounds = array<i64: 1, 32>}, {transform_indices = @transform_13, window_bounds = array<i64: 1, 1>}, {transform_indices = @transform_14, window_bounds = array<i64: 72, 1>}]} {
    %c0 = arith.constant 0 : index
    %c0_0 = arith.constant 0 : index
    %0 = vector.load %arg1[%c0, %c0_0] : memref<72x1xi32, #tpu.memory_space<vmem>>, vector<72x1xi32>
    %1 = tpu.iota {dimensions = array<i32: 1>} : vector<72x16xi32>
    %2 = vector.broadcast %0 : vector<72x1xi32> to vector<72x16xi32>
    %3 = arith.cmpi eq, %2, %1 : vector<72x16xi32>
    %c0_1 = arith.constant 0 : index
    %c0_2 = arith.constant 0 : index
    %4 = vector.load %arg2[%c0_1, %c0_2] : memref<72x1xi32, #tpu.memory_space<vmem>>, vector<72x1xi32>
    %5 = tpu.iota {dimensions = array<i32: 1>} : vector<72x16xi32>
    %6 = vector.broadcast %4 : vector<72x1xi32> to vector<72x16xi32>
    %7 = arith.cmpi eq, %6, %5 : vector<72x16xi32>
    %cst = arith.constant 1.000000e+00 : f32
    %cst_3 = arith.constant 0.000000e+00 : f32
    %8 = vector.broadcast %cst : f32 to vector<72x16xf32>
    %9 = vector.broadcast %cst_3 : f32 to vector<72x16xf32>
    %10 = arith.select %3, %8, %9 : vector<72x16xi1>, vector<72x16xf32>
    %11 = arith.truncf %10 : vector<72x16xf32> to vector<72x16xbf16>
    %cst_4 = arith.constant 1.000000e+00 : f32
    %cst_5 = arith.constant 0.000000e+00 : f32
    %12 = vector.broadcast %cst_4 : f32 to vector<72x16xf32>
    %13 = vector.broadcast %cst_5 : f32 to vector<72x16xf32>
    %14 = arith.select %7, %12, %13 : vector<72x16xi1>, vector<72x16xf32>
    %15 = arith.truncf %14 : vector<72x16xf32> to vector<72x16xbf16>
    %c0_6 = arith.constant 0 : index
    %c0_7 = arith.constant 0 : index
    %16 = vector.load %arg3[%c0_6, %c0_7] : memref<16x32xbf16, #tpu.memory_space<vmem>>, vector<16x32xbf16>
    %cst_8 = arith.constant dense<0.000000e+00> : vector<72x32xf32>
    %17 = tpu.matmul %11, %16, %cst_8 {dimension_numbers = #tpu.dot_dimension_numbers<[1], [0], [0], [1], [0, 0, 1, 1], [], []>} : vector<72x16xbf16>, vector<16x32xbf16>, vector<72x32xf32> -> vector<72x32xf32>
    %c0_9 = arith.constant 0 : index
    %c0_10 = arith.constant 0 : index
    %18 = vector.load %arg4[%c0_9, %c0_10] : memref<16x32xbf16, #tpu.memory_space<vmem>>, vector<16x32xbf16>
    %cst_11 = arith.constant dense<0.000000e+00> : vector<72x32xf32>
    %19 = tpu.matmul %15, %18, %cst_11 {dimension_numbers = #tpu.dot_dimension_numbers<[1], [0], [0], [1], [0, 0, 1, 1], [], []>} : vector<72x16xbf16>, vector<16x32xbf16>, vector<72x32xf32> -> vector<72x32xf32>
    %20 = arith.truncf %17 : vector<72x32xf32> to vector<72x32xbf16>
    %21 = arith.truncf %19 : vector<72x32xf32> to vector<72x32xbf16>
    %c0_12 = arith.constant 0 : index
    %c0_13 = arith.constant 0 : index
    %22 = vector.load %arg5[%c0_12, %c0_13] : memref<32x96xbf16, #tpu.memory_space<vmem>>, vector<32x96xbf16>
    %cst_14 = arith.constant dense<0.000000e+00> : vector<72x96xf32>
    %23 = tpu.matmul %20, %22, %cst_14 {dimension_numbers = #tpu.dot_dimension_numbers<[1], [0], [0], [1], [0, 0, 1, 1], [], []>} : vector<72x32xbf16>, vector<32x96xbf16>, vector<72x96xf32> -> vector<72x96xf32>
    %c0_15 = arith.constant 0 : index
    %c0_16 = arith.constant 0 : index
    %24 = vector.load %arg6[%c0_15, %c0_16] : memref<32x96xbf16, #tpu.memory_space<vmem>>, vector<32x96xbf16>
    %cst_17 = arith.constant dense<0.000000e+00> : vector<72x96xf32>
    %25 = tpu.matmul %21, %24, %cst_17 {dimension_numbers = #tpu.dot_dimension_numbers<[1], [0], [0], [1], [0, 0, 1, 1], [], []>} : vector<72x32xbf16>, vector<32x96xbf16>, vector<72x96xf32> -> vector<72x96xf32>
    %26 = arith.addf %23, %25 : vector<72x96xf32>
    %c0_18 = arith.constant 0 : index
    %c0_19 = arith.constant 0 : index
    %27 = vector.load %arg7[%c0_18, %c0_19] : memref<1x96xf32, #tpu.memory_space<vmem>>, vector<1x96xf32>
    %28 = vector.broadcast %27 : vector<1x96xf32> to vector<72x96xf32>
    %29 = arith.addf %26, %28 : vector<72x96xf32>
    %30 = arith.negf %29 : vector<72x96xf32>
    %31 = math.exp %30 : vector<72x96xf32>
    %cst_20 = arith.constant 1.000000e+00 : f32
    %32 = vector.broadcast %cst_20 : f32 to vector<72x96xf32>
    %33 = arith.addf %32, %31 : vector<72x96xf32>
    %34 = arith.divf %32, %33 : vector<72x96xf32>
    %35 = vector.extract_strided_slice %34 {offsets = [0, 0], sizes = [72, 32], strides = [1, 1]} : vector<72x96xf32> to vector<72x32xf32>
    %36 = arith.mulf %35, %17 : vector<72x32xf32>
    %37 = vector.extract_strided_slice %34 {offsets = [0, 32], sizes = [72, 32], strides = [1, 1]} : vector<72x96xf32> to vector<72x32xf32>
    %38 = arith.mulf %37, %19 : vector<72x32xf32>
    %39 = vector.extract_strided_slice %29 {offsets = [0, 64], sizes = [72, 32], strides = [1, 1]} : vector<72x96xf32> to vector<72x32xf32>
    %40 = arith.mulf %39, %19 : vector<72x32xf32>
    %41 = arith.truncf %36 : vector<72x32xf32> to vector<72x32xbf16>
    %c0_21 = arith.constant 0 : index
    %c0_22 = arith.constant 0 : index
    %42 = vector.load %arg8[%c0_21, %c0_22] : memref<32x32xbf16, #tpu.memory_space<vmem>>, vector<32x32xbf16>
    %cst_23 = arith.constant dense<0.000000e+00> : vector<72x32xf32>
    %43 = tpu.matmul %41, %42, %cst_23 {dimension_numbers = #tpu.dot_dimension_numbers<[1], [0], [0], [1], [0, 0, 1, 1], [], []>} : vector<72x32xbf16>, vector<32x32xbf16>, vector<72x32xf32> -> vector<72x32xf32>
    %44 = arith.truncf %38 : vector<72x32xf32> to vector<72x32xbf16>
    %c0_24 = arith.constant 0 : index
    %c0_25 = arith.constant 0 : index
    %45 = vector.load %arg9[%c0_24, %c0_25] : memref<32x32xbf16, #tpu.memory_space<vmem>>, vector<32x32xbf16>
    %cst_26 = arith.constant dense<0.000000e+00> : vector<72x32xf32>
    %46 = tpu.matmul %44, %45, %cst_26 {dimension_numbers = #tpu.dot_dimension_numbers<[1], [0], [0], [1], [0, 0, 1, 1], [], []>} : vector<72x32xbf16>, vector<32x32xbf16>, vector<72x32xf32> -> vector<72x32xf32>
    %47 = arith.addf %43, %46 : vector<72x32xf32>
    %c0_27 = arith.constant 0 : index
    %c0_28 = arith.constant 0 : index
    %48 = vector.load %arg10[%c0_27, %c0_28] : memref<1x32xf32, #tpu.memory_space<vmem>>, vector<1x32xf32>
    %49 = vector.broadcast %48 : vector<1x32xf32> to vector<72x32xf32>
    %50 = arith.addf %47, %49 : vector<72x32xf32>
    %cst_29 = arith.constant 0.000000e+00 : f32
    %51 = vector.broadcast %cst_29 : f32 to vector<72x32xf32>
    %52 = arith.maximumf %50, %51 : vector<72x32xf32>
    %53 = arith.truncf %52 : vector<72x32xf32> to vector<72x32xbf16>
    %c0_30 = arith.constant 0 : index
    %c0_31 = arith.constant 0 : index
    %54 = vector.load %arg11[%c0_30, %c0_31] : memref<32x32xbf16, #tpu.memory_space<vmem>>, vector<32x32xbf16>
    %cst_32 = arith.constant dense<0.000000e+00> : vector<72x32xf32>
    %55 = tpu.matmul %53, %54, %cst_32 {dimension_numbers = #tpu.dot_dimension_numbers<[1], [0], [0], [1], [0, 0, 1, 1], [], []>} : vector<72x32xbf16>, vector<32x32xbf16>, vector<72x32xf32> -> vector<72x32xf32>
    %c0_33 = arith.constant 0 : index
    %c0_34 = arith.constant 0 : index
    %56 = vector.load %arg12[%c0_33, %c0_34] : memref<1x32xf32, #tpu.memory_space<vmem>>, vector<1x32xf32>
    %57 = vector.broadcast %56 : vector<1x32xf32> to vector<72x32xf32>
    %58 = arith.addf %55, %57 : vector<72x32xf32>
    %cst_35 = arith.constant 0.000000e+00 : f32
    %59 = vector.broadcast %cst_35 : f32 to vector<72x32xf32>
    %60 = arith.maximumf %58, %59 : vector<72x32xf32>
    %c0_36 = arith.constant 0 : index
    %c0_37 = arith.constant 0 : index
    %61 = vector.load %arg13[%c0_36, %c0_37] : memref<1x32xf32, #tpu.memory_space<vmem>>, vector<1x32xf32>
    %62 = vector.broadcast %61 : vector<1x32xf32> to vector<72x32xf32>
    %63 = arith.mulf %60, %62 : vector<72x32xf32>
    %64 = arith.addf %63, %40 : vector<72x32xf32>
    %cst_38 = arith.constant dense<0.000000e+00> : vector<72xf32>
    %65 = vector.multi_reduction <add>, %64, %cst_38 [1] : vector<72x32xf32> to vector<72xf32>
    %66 = vector.shape_cast %65 : vector<72xf32> to vector<72x1xf32>
    %c0_39 = arith.constant 0 : index
    %c0_40 = arith.constant 0 : index
    %67 = memref.load %arg14[%c0_39, %c0_40] : memref<1x1xf32, #tpu.memory_space<smem>>
    %68 = vector.broadcast %67 : f32 to vector<72x1xf32>
    %69 = arith.addf %66, %68 : vector<72x1xf32>
    %c0_41 = arith.constant 0 : index
    %c0_42 = arith.constant 0 : index
    %70 = vector.load %arg15[%c0_41, %c0_42] : memref<72x1xf32, #tpu.memory_space<vmem>>, vector<72x1xf32>
    tpu.vector_store %arg15[%c0_41, %c0_42], %69 {strides = array<i32>} : memref<72x1xf32, #tpu.memory_space<vmem>>, vector<72x1xf32>,
    return
  }
  func.func @transform_0(%arg0: i32) -> (i32, i32) {
    %c0_i32 = arith.constant 0 : i32
    %c0_i32_0 = arith.constant 0 : i32
    return %arg0, %c0_i32 : i32, i32
  }
  func.func @transform_1(%arg0: i32) -> (i32, i32) {
    %c0_i32 = arith.constant 0 : i32
    %c0_i32_0 = arith.constant 0 : i32
    return %arg0, %c0_i32 : i32, i32
  }
  func.func @transform_2(%arg0: i32) -> (i32, i32) {
    %c0_i32 = arith.constant 0 : i32
    %c0_i32_0 = arith.constant 0 : i32
    %c0_i32_1 = arith.constant 0 : i32
    return %c0_i32, %c0_i32_0 : i32, i32
  }
  func.func @transform_3(%arg0: i32) -> (i32, i32) {
    %c0_i32 = arith.constant 0 : i32
    %c0_i32_0 = arith.constant 0 : i32
    %c0_i32_1 = arith.constant 0 : i32
    return %c0_i32, %c0_i32_0 : i32, i32
  }
  func.func @transform_4(%arg0: i32) -> (i32, i32) {
    %c0_i32 = arith.constant 0 : i32
    %c0_i32_0 = arith.constant 0 : i32
    %c0_i32_1 = arith.constant 0 : i32
    return %c0_i32, %c0_i32_0 : i32, i32
  }
  func.func @transform_5(%arg0: i32) -> (i32, i32) {
    %c0_i32 = arith.constant 0 : i32
    %c0_i32_0 = arith.constant 0 : i32
    %c0_i32_1 = arith.constant 0 : i32
    return %c0_i32, %c0_i32_0 : i32, i32
  }
  func.func @transform_6(%arg0: i32) -> (i32, i32) {
    %c0_i32 = arith.constant 0 : i32
    %c0_i32_0 = arith.constant 0 : i32
    %c0_i32_1 = arith.constant 0 : i32
    return %c0_i32, %c0_i32_0 : i32, i32
  }
  func.func @transform_7(%arg0: i32) -> (i32, i32) {
    %c0_i32 = arith.constant 0 : i32
    %c0_i32_0 = arith.constant 0 : i32
    %c0_i32_1 = arith.constant 0 : i32
    return %c0_i32, %c0_i32_0 : i32, i32
  }
  func.func @transform_8(%arg0: i32) -> (i32, i32) {
    %c0_i32 = arith.constant 0 : i32
    %c0_i32_0 = arith.constant 0 : i32
    %c0_i32_1 = arith.constant 0 : i32
    return %c0_i32, %c0_i32_0 : i32, i32
  }
  func.func @transform_9(%arg0: i32) -> (i32, i32) {
    %c0_i32 = arith.constant 0 : i32
    %c0_i32_0 = arith.constant 0 : i32
    %c0_i32_1 = arith.constant 0 : i32
    return %c0_i32, %c0_i32_0 : i32, i32
  }
  func.func @transform_10(%arg0: i32) -> (i32, i32) {
    %c0_i32 = arith.constant 0 : i32
    %c0_i32_0 = arith.constant 0 : i32
    %c0_i32_1 = arith.constant 0 : i32
    return %c0_i32, %c0_i32_0 : i32, i32
  }
  func.func @transform_11(%arg0: i32) -> (i32, i32) {
    %c0_i32 = arith.constant 0 : i32
    %c0_i32_0 = arith.constant 0 : i32
    %c0_i32_1 = arith.constant 0 : i32
    return %c0_i32, %c0_i32_0 : i32, i32
  }
  func.func @transform_12(%arg0: i32) -> (i32, i32) {
    %c0_i32 = arith.constant 0 : i32
    %c0_i32_0 = arith.constant 0 : i32
    %c0_i32_1 = arith.constant 0 : i32
    return %c0_i32, %c0_i32_0 : i32, i32
  }
  func.func @transform_13(%arg0: i32) -> (i32, i32) {
    %c0_i32 = arith.constant 0 : i32
    %c0_i32_0 = arith.constant 0 : i32
    %c0_i32_1 = arith.constant 0 : i32
    return %c0_i32, %c0_i32_0 : i32, i32
  }
  func.func @transform_14(%arg0: i32) -> (i32, i32) {
    %c0_i32 = arith.constant 0 : i32
    %c0_i32_0 = arith.constant 0 : i32
    return %arg0, %c0_i32 : i32, i32
  }
}

</mosaic_0001>

<llo_original>
// kernel: link_predictor_forward.1
$region0: #{link_predictor_forward.1}
  #allocation0 [shape = 'u32[]', space=smem, size = 0x4, offset = 0x4, fixed_abs, tag = 'smem constant byte address 0x4 - core index']
  #allocation1 [shape = 'u32[144,128]{1,0:T(1,128)}', space=vmem, size = 0x12000, scoped, tag = 'internal scratch']
  #allocation2 [shape = 'f32[1,1]{1,0:T(1,128)S(6)}', space=smem, size = 0x200, scoped, tag = 'scoped memory for link_predictor_forward.1']
  %s0 = inlined_call_operand.vmem [shape: s32[144,1], index: 0, kind: input, shape index: {}]
  %s1 = inlined_call_operand.vmem [shape: s32[144,1], index: 1, kind: input, shape index: {}]
  %s2 = inlined_call_operand.vmem [shape: bf16[16,32], index: 2, kind: input, shape index: {}]
  %s3 = inlined_call_operand.vmem [shape: bf16[16,32], index: 3, kind: input, shape index: {}]
  %s4 = inlined_call_operand.vmem [shape: bf16[32,96], index: 4, kind: input, shape index: {}]
  %s5 = inlined_call_operand.vmem [shape: bf16[32,96], index: 5, kind: input, shape index: {}]
  %s6 = inlined_call_operand.vmem [shape: f32[1,96], index: 6, kind: input, shape index: {}]
  %s7 = inlined_call_operand.vmem [shape: bf16[32,32], index: 7, kind: input, shape index: {}]
  %s8 = inlined_call_operand.vmem [shape: bf16[32,32], index: 8, kind: input, shape index: {}]
  %s9 = inlined_call_operand.vmem [shape: f32[1,32], index: 9, kind: input, shape index: {}]
  %s10 = inlined_call_operand.vmem [shape: bf16[32,32], index: 10, kind: input, shape index: {}]
  %s11 = inlined_call_operand.vmem [shape: f32[1,32], index: 11, kind: input, shape index: {}]
  %s12 = inlined_call_operand.vmem [shape: f32[1,32], index: 12, kind: input, shape index: {}]
  %s13 = inlined_call_operand.<no memory space> [shape: f32[1,1], index: 13, kind: input, shape index: {}]
  %s14 = inlined_call_operand.vmem [shape: f32[144,1], index: 14, kind: output, shape index: {}]
  %s15 = sld [smem:[#allocation0]]
  $region89: #{link_predictor_forward.1} parent=0
    _
  %s17 = ssub.s32 1, %s15
  %s18 = scalar_select 0, %s17, %s15
  %19 = sst [smem:[#allocation2]] %s13
  loop: start=0, step=1, limit=4
  $region2: #{link_predictor_forward.1} parent=0 // loop_pre_header
    _
  $region3: #{link_predictor_forward.1} parent=0 // loop_header
    %s21 = sphi 0, %s25
    %p22 = scmp.ge.s32.totalorder %s21, 4
    %s31 = sphi 0, %s33
    %s34 = sphi 0, %s31
    %s35 = sphi 0, %s34
    %s51 = sphi 0, %s35
    %s57 = sphi 0, %s59
    %s60 = sphi 0, %s57
    %s61 = sphi 0, %s60
    %s77 = sphi 0, %s61
    %s81 = sphi 0, %s81
    %s83 = sphi 0, %s81
    %s84 = sphi 0, %s83
    %s98 = sphi 0, %s84
    %s102 = sphi 0, %s102
    %s104 = sphi 0, %s102
    %s105 = sphi 0, %s104
    %s119 = sphi 0, %s105
    %s123 = sphi 0, %s123
    %s125 = sphi 0, %s123
    %s126 = sphi 0, %s125
    %s140 = sphi 0, %s126
    %s144 = sphi 0, %s144
    %s146 = sphi 0, %s144
    %s147 = sphi 0, %s146
    %s161 = sphi 0, %s147
    %s165 = sphi 0, %s165
    %s167 = sphi 0, %s165
    %s168 = sphi 0, %s167
    %s182 = sphi 0, %s168
    %s186 = sphi 0, %s186
    %s188 = sphi 0, %s186
    %s189 = sphi 0, %s188
    %s203 = sphi 0, %s189
    %s207 = sphi 0, %s207
    %s209 = sphi 0, %s207
    %s210 = sphi 0, %s209
    %s224 = sphi 0, %s210
    %s228 = sphi 0, %s228
    %s230 = sphi 0, %s228
    %s231 = sphi 0, %s230
    %s245 = sphi 0, %s231
    %s249 = sphi 0, %s249
    %s251 = sphi 0, %s249
    %s252 = sphi 0, %s251
    %s266 = sphi 0, %s252
    %s270 = sphi 0, %s270
    %s272 = sphi 0, %s270
    %s273 = sphi 0, %s272
    %s287 = sphi 0, %s273
    %s291 = sphi 0, %s291
    %s293 = sphi 0, %s291
    %s294 = sphi 0, %s293
    %s308 = sphi 0, %s294
    %s312 = sphi 0, %s312
    %s314 = sphi 0, %s312
    %s315 = sphi 0, %s314
    %s329 = sphi 0, %s315
    %s335 = sphi 0, %s337
    %s338 = sphi 0, %s335
    %s339 = sphi 0, %s338
    %s355 = sphi 0, %s339
  $region4: #{link_predictor_forward.1} parent=0 // loop_header_branch
    %24 = sbr.rel (%p22) target = $region8
  $region5: #{link_predictor_forward.1} parent=0 // loop_body
    %s26 = ssub.s32 %s21, 1
    %s27 = ssub.s32 %s21, 2
    %s28 = sadd.s32 %s21, 1
    %s29 = ssub.s32 %s21, %s28
    %p30 = scmp.eq.s32.totalorder %s29, 0
    %s32 = sadd.s32 %s31, 1
    %s33 = scalar_select %p30, %s31, %s32
    %p36 = pneg %p30
    %p37 = scmp.eq.s32.totalorder %s21, 1
    %p38 = por %p36, %p37
    %p39 = scmp.ne.s32.totalorder %s31, %s34
    %p40 = scmp.eq.s32.totalorder %s21, 0
    %p41 = por %p39, %p40
    %p42 = scmp.ne.s32.totalorder %s31, %s34
    %p43 = scmp.eq.s32.totalorder %s26, 1
    %p44 = por %p42, %p43
    %p45 = scmp.ne.s32.totalorder %s34, %s35
    %p46 = scmp.eq.s32.totalorder %s26, 0
    %p47 = por %p45, %p46
    %p48 = scmp.ne.s32.totalorder %s34, %s35
    %p49 = scmp.eq.s32.totalorder %s27, 1
    %p50 = por %p48, %p49
    %p52 = scmp.ne.s32.totalorder %s35, %s51
    %p53 = scmp.eq.s32.totalorder %s27, 0
    %p54 = por %p52, %p53
    %s55 = ssub.s32 %s21, %s28
    %p56 = scmp.eq.s32.totalorder %s55, 0
    %s58 = sadd.s32 %s57, 1
    %s59 = scalar_select %p56, %s57, %s58
    %p62 = pneg %p56
    %p63 = scmp.eq.s32.totalorder %s21, 1
    %p64 = por %p62, %p63
    %p65 = scmp.ne.s32.totalorder %s57, %s60
    %p66 = scmp.eq.s32.totalorder %s21, 0
    %p67 = por %p65, %p66
    %p68 = scmp.ne.s32.totalorder %s57, %s60
    %p69 = scmp.eq.s32.totalorder %s26, 1
    %p70 = por %p68, %p69
    %p71 = scmp.ne.s32.totalorder %s60, %s61
    %p72 = scmp.eq.s32.totalorder %s26, 0
    %p73 = por %p71, %p72
    %p74 = scmp.ne.s32.totalorder %s60, %s61
    %p75 = scmp.eq.s32.totalorder %s27, 1
    %p76 = por %p74, %p75
    %p78 = scmp.ne.s32.totalorder %s61, %s77
    %p79 = scmp.eq.s32.totalorder %s27, 0
    %p80 = por %p78, %p79
    %s82 = sadd.s32 %s81, 1
    %p85 = scmp.eq.s32.totalorder %s21, 1
    %p86 = scmp.ne.s32.totalorder %s81, %s83
    %p87 = scmp.eq.s32.totalorder %s21, 0
    %p88 = por %p86, %p87
    %p89 = scmp.ne.s32.totalorder %s81, %s83
    %p90 = scmp.eq.s32.totalorder %s26, 1
    %p91 = por %p89, %p90
    %p92 = scmp.ne.s32.totalorder %s83, %s84
    %p93 = scmp.eq.s32.totalorder %s26, 0
    %p94 = por %p92, %p93
    %p95 = scmp.ne.s32.totalorder %s83, %s84
    %p96 = scmp.eq.s32.totalorder %s27, 1
    %p97 = por %p95, %p96
    %p99 = scmp.ne.s32.totalorder %s84, %s98
    %p100 = scmp.eq.s32.totalorder %s27, 0
    %p101 = por %p99, %p100
    %s103 = sadd.s32 %s102, 1
    %p106 = scmp.eq.s32.totalorder %s21, 1
    %p107 = scmp.ne.s32.totalorder %s102, %s104
    %p108 = scmp.eq.s32.totalorder %s21, 0
    %p109 = por %p107, %p108
    %p110 = scmp.ne.s32.totalorder %s102, %s104
    %p111 = scmp.eq.s32.totalorder %s26, 1
    %p112 = por %p110, %p111
    %p113 = scmp.ne.s32.totalorder %s104, %s105
    %p114 = scmp.eq.s32.totalorder %s26, 0
    %p115 = por %p113, %p114
    %p116 = scmp.ne.s32.totalorder %s104, %s105
    %p117 = scmp.eq.s32.totalorder %s27, 1
    %p118 = por %p116, %p117
    %p120 = scmp.ne.s32.totalorder %s105, %s119
    %p121 = scmp.eq.s32.totalorder %s27, 0
    %p122 = por %p120, %p121
    %s124 = sadd.s32 %s123, 1
    %p127 = scmp.eq.s32.totalorder %s21, 1
    %p128 = scmp.ne.s32.totalorder %s123, %s125
    %p129 = scmp.eq.s32.totalorder %s21, 0
    %p130 = por %p128, %p129
    %p131 = scmp.ne.s32.totalorder %s123, %s125
    %p132 = scmp.eq.s32.totalorder %s26, 1
    %p133 = por %p131, %p132
    %p134 = scmp.ne.s32.totalorder %s125, %s126
    %p135 = scmp.eq.s32.totalorder %s26, 0
    %p136 = por %p134, %p135
    %p137 = scmp.ne.s32.totalorder %s125, %s126
    %p138 = scmp.eq.s32.totalorder %s27, 1
    %p139 = por %p137, %p138
    %p141 = scmp.ne.s32.totalorder %s126, %s140
    %p142 = scmp.eq.s32.totalorder %s27, 0
    %p143 = por %p141, %p142
    %s145 = sadd.s32 %s144, 1
    %p148 = scmp.eq.s32.totalorder %s21, 1
    %p149 = scmp.ne.s32.totalorder %s144, %s146
    %p150 = scmp.eq.s32.totalorder %s21, 0
    %p151 = por %p149, %p150
    %p152 = scmp.ne.s32.totalorder %s144, %s146
    %p153 = scmp.eq.s32.totalorder %s26, 1
    %p154 = por %p152, %p153
    %p155 = scmp.ne.s32.totalorder %s146, %s147
    %p156 = scmp.eq.s32.totalorder %s26, 0
    %p157 = por %p155, %p156
    %p158 = scmp.ne.s32.totalorder %s146, %s147
    %p159 = scmp.eq.s32.totalorder %s27, 1
    %p160 = por %p158, %p159
    %p162 = scmp.ne.s32.totalorder %s147, %s161
    %p163 = scmp.eq.s32.totalorder %s27, 0
    %p164 = por %p162, %p163
    %s166 = sadd.s32 %s165, 1
    %p169 = scmp.eq.s32.totalorder %s21, 1
    %p170 = scmp.ne.s32.totalorder %s165, %s167
    %p171 = scmp.eq.s32.totalorder %s21, 0
    %p172 = por %p170, %p171
    %p173 = scmp.ne.s32.totalorder %s165, %s167
    %p174 = scmp.eq.s32.totalorder %s26, 1
    %p175 = por %p173, %p174
    %p176 = scmp.ne.s32.totalorder %s167, %s168
    %p177 = scmp.eq.s32.totalorder %s26, 0
    %p178 = por %p176, %p177
    %p179 = scmp.ne.s32.totalorder %s167, %s168
    %p180 = scmp.eq.s32.totalorder %s27, 1
    %p181 = por %p179, %p180
    %p183 = scmp.ne.s32.totalorder %s168, %s182
    %p184 = scmp.eq.s32.totalorder %s27, 0
    %p185 = por %p183, %p184
    %s187 = sadd.s32 %s186, 1
    %p190 = scmp.eq.s32.totalorder %s21, 1
    %p191 = scmp.ne.s32.totalorder %s186, %s188
    %p192 = scmp.eq.s32.totalorder %s21, 0
    %p193 = por %p191, %p192
    %p194 = scmp.ne.s32.totalorder %s186, %s188
    %p195 = scmp.eq.s32.totalorder %s26, 1
    %p196 = por %p194, %p195
    %p197 = scmp.ne.s32.totalorder %s188, %s189
    %p198 = scmp.eq.s32.totalorder %s26, 0
    %p199 = por %p197, %p198
    %p200 = scmp.ne.s32.totalorder %s188, %s189
    %p201 = scmp.eq.s32.totalorder %s27, 1
    %p202 = por %p200, %p201
    %p204 = scmp.ne.s32.totalorder %s189, %s203
    %p205 = scmp.eq.s32.totalorder %s27, 0
    %p206 = por %p204, %p205
    %s208 = sadd.s32 %s207, 1
    %p211 = scmp.eq.s32.totalorder %s21, 1
    %p212 = scmp.ne.s32.totalorder %s207, %s209
    %p213 = scmp.eq.s32.totalorder %s21, 0
    %p214 = por %p212, %p213
    %p215 = scmp.ne.s32.totalorder %s207, %s209
    %p216 = scmp.eq.s32.totalorder %s26, 1
    %p217 = por %p215, %p216
    %p218 = scmp.ne.s32.totalorder %s209, %s210
    %p219 = scmp.eq.s32.totalorder %s26, 0
    %p220 = por %p218, %p219
    %p221 = scmp.ne.s32.totalorder %s209, %s210
    %p222 = scmp.eq.s32.totalorder %s27, 1
    %p223 = por %p221, %p222
    %p225 = scmp.ne.s32.totalorder %s210, %s224
    %p226 = scmp.eq.s32.totalorder %s27, 0
    %p227 = por %p225, %p226
    %s229 = sadd.s32 %s228, 1
    %p232 = scmp.eq.s32.totalorder %s21, 1
    %p233 = scmp.ne.s32.totalorder %s228, %s230
    %p234 = scmp.eq.s32.totalorder %s21, 0
    %p235 = por %p233, %p234
    %p236 = scmp.ne.s32.totalorder %s228, %s230
    %p237 = scmp.eq.s32.totalorder %s26, 1
    %p238 = por %p236, %p237
    %p239 = scmp.ne.s32.totalorder %s230, %s231
    %p240 = scmp.eq.s32.totalorder %s26, 0
    %p241 = por %p239, %p240
    %p242 = scmp.ne.s32.totalorder %s230, %s231
    %p243 = scmp.eq.s32.totalorder %s27, 1
    %p244 = por %p242, %p243
    %p246 = scmp.ne.s32.totalorder %s231, %s245
    %p247 = scmp.eq.s32.totalorder %s27, 0
    %p248 = por %p246, %p247
    %s250 = sadd.s32 %s249, 1
    %p253 = scmp.eq.s32.totalorder %s21, 1
    %p254 = scmp.ne.s32.totalorder %s249, %s251
    %p255 = scmp.eq.s32.totalorder %s21, 0
    %p256 = por %p254, %p255
    %p257 = scmp.ne.s32.totalorder %s249, %s251
    %p258 = scmp.eq.s32.totalorder %s26, 1
    %p259 = por %p257, %p258
    %p260 = scmp.ne.s32.totalorder %s251, %s252
    %p261 = scmp.eq.s32.totalorder %s26, 0
    %p262 = por %p260, %p261
    %p263 = scmp.ne.s32.totalorder %s251, %s252
    %p264 = scmp.eq.s32.totalorder %s27, 1
    %p265 = por %p263, %p264
    %p267 = scmp.ne.s32.totalorder %s252, %s266
    %p268 = scmp.eq.s32.totalorder %s27, 0
    %p269 = por %p267, %p268
    %s271 = sadd.s32 %s270, 1
    %p274 = scmp.eq.s32.totalorder %s21, 1
    %p275 = scmp.ne.s32.totalorder %s270, %s272
    %p276 = scmp.eq.s32.totalorder %s21, 0
    %p277 = por %p275, %p276
    %p278 = scmp.ne.s32.totalorder %s270, %s272
    %p279 = scmp.eq.s32.totalorder %s26, 1
    %p280 = por %p278, %p279
    %p281 = scmp.ne.s32.totalorder %s272, %s273
    %p282 = scmp.eq.s32.totalorder %s26, 0
    %p283 = por %p281, %p282
    %p284 = scmp.ne.s32.totalorder %s272, %s273
    %p285 = scmp.eq.s32.totalorder %s27, 1
    %p286 = por %p284, %p285
    %p288 = scmp.ne.s32.totalorder %s273, %s287
    %p289 = scmp.eq.s32.totalorder %s27, 0
    %p290 = por %p288, %p289
    %s292 = sadd.s32 %s291, 1
    %p295 = scmp.eq.s32.totalorder %s21, 1
    %p296 = scmp.ne.s32.totalorder %s291, %s293
    %p297 = scmp.eq.s32.totalorder %s21, 0
    %p298 = por %p296, %p297
    %p299 = scmp.ne.s32.totalorder %s291, %s293
    %p300 = scmp.eq.s32.totalorder %s26, 1
    %p301 = por %p299, %p300
    %p302 = scmp.ne.s32.totalorder %s293, %s294
    %p303 = scmp.eq.s32.totalorder %s26, 0
    %p304 = por %p302, %p303
    %p305 = scmp.ne.s32.totalorder %s293, %s294
    %p306 = scmp.eq.s32.totalorder %s27, 1
    %p307 = por %p305, %p306
    %p309 = scmp.ne.s32.totalorder %s294, %s308
    %p310 = scmp.eq.s32.totalorder %s27, 0
    %p311 = por %p309, %p310
    %s313 = sadd.s32 %s312, 1
    %p316 = scmp.eq.s32.totalorder %s21, 1
    %p317 = scmp.ne.s32.totalorder %s312, %s314
    %p318 = scmp.eq.s32.totalorder %s21, 0
    %p319 = por %p317, %p318
    %p320 = scmp.ne.s32.totalorder %s312, %s314
    %p321 = scmp.eq.s32.totalorder %s26, 1
    %p322 = por %p320, %p321
    %p323 = scmp.ne.s32.totalorder %s314, %s315
    %p324 = scmp.eq.s32.totalorder %s26, 0
    %p325 = por %p323, %p324
    %p326 = scmp.ne.s32.totalorder %s314, %s315
    %p327 = scmp.eq.s32.totalorder %s27, 1
    %p328 = por %p326, %p327
    %p330 = scmp.ne.s32.totalorder %s315, %s329
    %p331 = scmp.eq.s32.totalorder %s27, 0
    %p332 = por %p330, %p331
    %s333 = ssub.s32 %s21, %s28
    %p334 = scmp.eq.s32.totalorder %s333, 0
    %s336 = sadd.s32 %s335, 1
    %s337 = scalar_select %p334, %s335, %s336
    %p340 = pneg %p334
    %p341 = scmp.eq.s32.totalorder %s21, 1
    %p342 = por %p340, %p341
    %p343 = scmp.ne.s32.totalorder %s335, %s338
    %p344 = scmp.eq.s32.totalorder %s21, 0
    %p345 = por %p343, %p344
    %p346 = scmp.ne.s32.totalorder %s335, %s338
    %p347 = scmp.eq.s32.totalorder %s26, 1
    %p348 = por %p346, %p347
    %p349 = scmp.ne.s32.totalorder %s338, %s339
    %p350 = scmp.eq.s32.totalorder %s26, 0
    %p351 = por %p349, %p350
    %p352 = scmp.ne.s32.totalorder %s338, %s339
    %p353 = scmp.eq.s32.totalorder %s27, 1
    %p354 = por %p352, %p353
    %p356 = scmp.ne.s32.totalorder %s339, %s355
    %p357 = scmp.eq.s32.totalorder %s27, 0
    %p358 = por %p356, %p357
    %p359 = scmp.le.s32.totalorder 1, %s21
    %p360 = scmp.lt.s32.totalorder %s21, 3
    %p361 = pnand %p359, %p360
    %p362 = pneg %p361
    // Predicated region
    $region9: #{link_predictor_forward.1} parent=5 // pred_check
      _
    $region10: #{link_predictor_forward.1} parent=5 // pred_check_branch
      %364 = sbr.rel (%p361) target = $region12
    $region11: #{link_predictor_forward.1} parent=5 // pred_region
      %s365 = ssub.s32 %s21, 1
      // Predicated region
      $region13: #{link_predictor_forward.1} parent=11 // pred_check
        %p366 = pneg %p94
      $region14: #{link_predictor_forward.1} parent=11 // pred_check_branch
        %368 = sbr.rel (%p366) target = $region16
      $region15: #{link_predictor_forward.1} parent=11 // pred_region
        _
      $region16: #{link_predictor_forward.1} parent=11 // pred_fallthru
        _
      // Predicated region
      $region17: #{link_predictor_forward.1} parent=11 // pred_check
        %p369 = pneg %p115
      $region18: #{link_predictor_forward.1} parent=11 // pred_check_branch
        %371 = sbr.rel (%p369) target = $region20
      $region19: #{link_predictor_forward.1} parent=11 // pred_region
        _
      $region20: #{link_predictor_forward.1} parent=11 // pred_fallthru
        _
      // Predicated region
      $region21: #{link_predictor_forward.1} parent=11 // pred_check
        %p372 = pneg %p136
      $region22: #{link_predictor_forward.1} parent=11 // pred_check_branch
        %374 = sbr.rel (%p372) target = $region24
      $region23: #{link_predictor_forward.1} parent=11 // pred_region
        _
      $region24: #{link_predictor_forward.1} parent=11 // pred_fallthru
        _
      // Predicated region
      $region25: #{link_predictor_forward.1} parent=11 // pred_check
        %p375 = pneg %p157
      $region26: #{link_predictor_forward.1} parent=11 // pred_check_branch
        %377 = sbr.rel (%p375) target = $region28
      $region27: #{link_predictor_forward.1} parent=11 // pred_region
        _
      $region28: #{link_predictor_forward.1} parent=11 // pred_fallthru
        _
      // Predicated region
      $region29: #{link_predictor_forward.1} parent=11 // pred_check
        %p378 = pneg %p178
      $region30: #{link_predictor_forward.1} parent=11 // pred_check_branch
        %380 = sbr.rel (%p378) target = $region32
      $region31: #{link_predictor_forward.1} parent=11 // pred_region
        _
      $region32: #{link_predictor_forward.1} parent=11 // pred_fallthru
        _
      // Predicated region
      $region33: #{link_predictor_forward.1} parent=11 // pred_check
        %p381 = pneg %p199
      $region34: #{link_predictor_forward.1} parent=11 // pred_check_branch
        %383 = sbr.rel (%p381) target = $region36
      $region35: #{link_predictor_forward.1} parent=11 // pred_region
        _
      $region36: #{link_predictor_forward.1} parent=11 // pred_fallthru
        _
      // Predicated region
      $region37: #{link_predictor_forward.1} parent=11 // pred_check
        %p384 = pneg %p220
      $region38: #{link_predictor_forward.1} parent=11 // pred_check_branch
        %386 = sbr.rel (%p384) target = $region40
      $region39: #{link_predictor_forward.1} parent=11 // pred_region
        _
      $region40: #{link_predictor_forward.1} parent=11 // pred_fallthru
        _
      // Predicated region
      $region41: #{link_predictor_forward.1} parent=11 // pred_check
        %p387 = pneg %p241
      $region42: #{link_predictor_forward.1} parent=11 // pred_check_branch
        %389 = sbr.rel (%p387) target = $region44
      $region43: #{link_predictor_forward.1} parent=11 // pred_region
        _
      $region44: #{link_predictor_forward.1} parent=11 // pred_fallthru
        _
      // Predicated region
      $region45: #{link_predictor_forward.1} parent=11 // pred_check
        %p390 = pneg %p262
      $region46: #{link_predictor_forward.1} parent=11 // pred_check_branch
        %392 = sbr.rel (%p390) target = $region48
      $region47: #{link_predictor_forward.1} parent=11 // pred_region
        _
      $region48: #{link_predictor_forward.1} parent=11 // pred_fallthru
        _
      // Predicated region
      $region49: #{link_predictor_forward.1} parent=11 // pred_check
        %p393 = pneg %p283
      $region50: #{link_predictor_forward.1} parent=11 // pred_check_branch
        %395 = sbr.rel (%p393) target = $region52
      $region51: #{link_predictor_forward.1} parent=11 // pred_region
        _
      $region52: #{link_predictor_forward.1} parent=11 // pred_fallthru
        _
      // Predicated region
      $region53: #{link_predictor_forward.1} parent=11 // pred_check
        %p396 = pneg %p304
      $region54: #{link_predictor_forward.1} parent=11 // pred_check_branch
        %398 = sbr.rel (%p396) target = $region56
      $region55: #{link_predictor_forward.1} parent=11 // pred_region
        _
      $region56: #{link_predictor_forward.1} parent=11 // pred_fallthru
        _
      // Predicated region
      $region57: #{link_predictor_forward.1} parent=11 // pred_check
        %p399 = pneg %p325
      $region58: #{link_predictor_forward.1} parent=11 // pred_check_branch
        %401 = sbr.rel (%p399) target = $region60
      $region59: #{link_predictor_forward.1} parent=11 // pred_region
        _
      $region60: #{link_predictor_forward.1} parent=11 // pred_fallthru
        _
    $region12: #{link_predictor_forward.1} parent=5 // pred_fallthru
      _
    %p402 = scmp.lt.s32.totalorder %s21, 2
    // Predicated region
    $region61: #{link_predictor_forward.1} parent=5 // pred_check
      %p403 = pneg %p402
    $region62: #{link_predictor_forward.1} parent=5 // pred_check_branch
      %405 = sbr.rel (%p403) target = $region64
    $region63: #{link_predictor_forward.1} parent=5 // pred_region
      // Predicated region
      $region65: #{link_predictor_forward.1} parent=63 // pred_check
        %p406 = pneg %p41
      $region66: #{link_predictor_forward.1} parent=63 // pred_check_branch
        %408 = sbr.rel (%p406) target = $region68
      $region67: #{link_predictor_forward.1} parent=63 // pred_region
        %s409 = smul.u32 9, %s21
        %p410 = scmp.lt.s32.totalorder %s409, 17
        %s411 = scalar_select %p410, %s409, 17
        %s412 = smul.addr %s411, 8
        %s413 = scalar_lea.vmem %s0, %s412
        %s414 = smul.u32 9, %s21
      $region68: #{link_predictor_forward.1} parent=63 // pred_fallthru
        _
      // Predicated region
      $region69: #{link_predictor_forward.1} parent=63 // pred_check
        %p415 = pneg %p67
      $region70: #{link_predictor_forward.1} parent=63 // pred_check_branch
        %417 = sbr.rel (%p415) target = $region72
      $region71: #{link_predictor_forward.1} parent=63 // pred_region
        %s418 = smul.u32 9, %s21
        %p419 = scmp.lt.s32.totalorder %s418, 17
        %s420 = scalar_select %p419, %s418, 17
        %s421 = smul.addr %s420, 8
        %s422 = scalar_lea.vmem %s1, %s421
        %s423 = smul.u32 9, %s21
      $region72: #{link_predictor_forward.1} parent=63 // pred_fallthru
        _
    $region64: #{link_predictor_forward.1} parent=5 // pred_fallthru
      _
    %p424 = scmp.le.s32.totalorder 1, %s21
    %p425 = scmp.lt.s32.totalorder %s21, 3
    %p426 = pnand %p424, %p425
    %p427 = pneg %p426
    // Predicated region
    $region73: #{link_predictor_forward.1} parent=5 // pred_check
      _
    $region74: #{link_predictor_forward.1} parent=5 // pred_check_branch
      %429 = sbr.rel (%p426) target = $region76
    $region75: #{link_predictor_forward.1} parent=5 // pred_region
      %s430 = ssub.s32 %s21, 1
      %s431 = smul.u32 9, %s26
      %p432 = scmp.lt.s32.totalorder %s431, 17
      %s433 = scalar_select %p432, %s431, 17
      %s434 = smul.addr %s433, 8
      %s435 = scalar_lea.vmem %s0, %s434
      %p436 = pneg %p47
      %p437 = pneg %p44
      %s438 = smul.u32 9, %s26
      %p439 = scmp.lt.s32.totalorder %s438, 17
      %s440 = scalar_select %p439, %s438, 17
      %s441 = smul.addr %s440, 8
      %s442 = scalar_lea.vmem %s1, %s441
      %p443 = pneg %p73
      %p444 = pneg %p70
      %p445 = pneg %p94
      %p446 = pneg %p91
      %p447 = pneg %p115
      %p448 = pneg %p112
      %p449 = pneg %p136
      %p450 = pneg %p133
      %p451 = pneg %p157
      %p452 = pneg %p154
      %p453 = pneg %p178
      %p454 = pneg %p175
      %p455 = pneg %p199
      %p456 = pneg %p196
      %p457 = pneg %p220
      %p458 = pneg %p217
      %p459 = pneg %p241
      %p460 = pneg %p238
      %p461 = pneg %p262
      %p462 = pneg %p259
      %p463 = pneg %p283
      %p464 = pneg %p280
      %p465 = pneg %p304
      %p466 = pneg %p301
      %p467 = pneg %p325
      %p468 = pneg %p322
      %p469 = pneg %p351
      %p470 = pneg %p348
      %s471 = smul.u32 9, %s26
      %p472 = scmp.lt.s32.totalorder %s471, 17
      %s473 = scalar_select %p472, %s471, 17
      %s474 = smul.addr %s473, 8
      %s475 = scalar_lea.vmem %s14, %s474
      %s476 = smul.u32 9, %s26
      %p477 = scmp.lt.s32.totalorder %s476, 17
      %s478 = scalar_select %p477, %s476, 17
      %s479 = smul.addr %s478, 8
      %s480 = scalar_lea.vmem %s0, %s479
      %s481 = smul.u32 9, %s26
      %s482 = smul.u32 9, %s26
      %p483 = scmp.lt.s32.totalorder %s482, 17
      %s484 = scalar_select %p483, %s482, 17
      %s485 = smul.addr %s484, 8
      %s486 = scalar_lea.vmem %s1, %s485
      %s487 = smul.u32 9, %s26
      %s488 = smul.u32 9, %s26
      %p489 = scmp.lt.s32.totalorder %s488, 17
      %s490 = scalar_select %p489, %s488, 17
      %s491 = smul.addr %s490, 8
      %s492 = scalar_lea.vmem %s14, %s491
      %s493 = smul.u32 9, %s26
      %v495 = vld [vmem:[%s480] sm:$0xff]
      %v496 = vld [vmem:[%s480 + $0x8] sm:$0xff]
      %v497 = vld [vmem:[%s480 + $0x10] sm:$0xff]
      %v498 = vld [vmem:[%s480 + $0x18] sm:$0xff]
      %v499 = vld [vmem:[%s480 + $0x20] sm:$0xff]
      %v500 = vld [vmem:[%s480 + $0x28] sm:$0xff]
      %v501 = vld [vmem:[%s480 + $0x30] sm:$0xff]
      %v502 = vld [vmem:[%s480 + $0x38] sm:$0xff]
      %v503 = vld [vmem:[%s480 + $0x40] sm:$0xff]
      %v504 = vlaneseq
      %v505 = vand.u32 %v504, 127
      %506 = vset.pattern.permute.xlu0 0
      %507 = vperm.xlu0 %506, %v495
      %v508 = vpop.permute.xlu0 %507
      %509 = vset.pattern.permute.xlu0 0
      %510 = vperm.xlu0 %509, %v496
      %v511 = vpop.permute.xlu0 %510
      %512 = vset.pattern.permute.xlu0 0
      %513 = vperm.xlu0 %512, %v497
      %v514 = vpop.permute.xlu0 %513
      %515 = vset.pattern.permute.xlu0 0
      %516 = vperm.xlu0 %515, %v498
      %v517 = vpop.permute.xlu0 %516
      %518 = vset.pattern.permute.xlu0 0
      %519 = vperm.xlu0 %518, %v499
      %v520 = vpop.permute.xlu0 %519
      %521 = vset.pattern.permute.xlu0 0
      %522 = vperm.xlu0 %521, %v500
      %v523 = vpop.permute.xlu0 %522
      %524 = vset.pattern.permute.xlu0 0
      %525 = vperm.xlu0 %524, %v501
      %v526 = vpop.permute.xlu0 %525
      %527 = vset.pattern.permute.xlu0 0
      %528 = vperm.xlu0 %527, %v502
      %v529 = vpop.permute.xlu0 %528
      %530 = vset.pattern.permute.xlu0 0
      %531 = vperm.xlu0 %530, %v503
      %v532 = vpop.permute.xlu0 %531
      %vm533 = vcmp.eq.s32.totalorder %v508, %v505
      %vm534 = vcmp.eq.s32.totalorder %v511, %v505
      %vm535 = vcmp.eq.s32.totalorder %v514, %v505
      %vm536 = vcmp.eq.s32.totalorder %v517, %v505
      %vm537 = vcmp.eq.s32.totalorder %v520, %v505
      %vm538 = vcmp.eq.s32.totalorder %v523, %v505
      %vm539 = vcmp.eq.s32.totalorder %v526, %v505
      %vm540 = vcmp.eq.s32.totalorder %v529, %v505
      %vm541 = vcmp.eq.s32.totalorder %v532, %v505
      %v542 = vld [vmem:[%s486] sm:$0xff]
      %v543 = vld [vmem:[%s486 + $0x8] sm:$0xff]
      %v544 = vld [vmem:[%s486 + $0x10] sm:$0xff]
      %v545 = vld [vmem:[%s486 + $0x18] sm:$0xff]
      %v546 = vld [vmem:[%s486 + $0x20] sm:$0xff]
      %v547 = vld [vmem:[%s486 + $0x28] sm:$0xff]
      %v548 = vld [vmem:[%s486 + $0x30] sm:$0xff]
      %v549 = vld [vmem:[%s486 + $0x38] sm:$0xff]
      %v550 = vld [vmem:[%s486 + $0x40] sm:$0xff]
      %551 = vset.pattern.permute.xlu0 0
      %552 = vperm.xlu0 %551, %v542
      %v553 = vpop.permute.xlu0 %552
      %554 = vset.pattern.permute.xlu0 0
      %555 = vperm.xlu0 %554, %v543
      %v556 = vpop.permute.xlu0 %555
      %557 = vset.pattern.permute.xlu0 0
      %558 = vperm.xlu0 %557, %v544
      %v559 = vpop.permute.xlu0 %558
      %560 = vset.pattern.permute.xlu0 0
      %561 = vperm.xlu0 %560, %v545
      %v562 = vpop.permute.xlu0 %561
      %563 = vset.pattern.permute.xlu0 0
      %564 = vperm.xlu0 %563, %v546
      %v565 = vpop.permute.xlu0 %564
      %566 = vset.pattern.permute.xlu0 0
      %567 = vperm.xlu0 %566, %v547
      %v568 = vpop.permute.xlu0 %567
      %569 = vset.pattern.permute.xlu0 0
      %570 = vperm.xlu0 %569, %v548
      %v571 = vpop.permute.xlu0 %570
      %572 = vset.pattern.permute.xlu0 0
      %573 = vperm.xlu0 %572, %v549
      %v574 = vpop.permute.xlu0 %573
      %575 = vset.pattern.permute.xlu0 0
      %576 = vperm.xlu0 %575, %v550
      %v577 = vpop.permute.xlu0 %576
      %vm578 = vcmp.eq.s32.totalorder %v553, %v505
      %vm579 = vcmp.eq.s32.totalorder %v556, %v505
      %vm580 = vcmp.eq.s32.totalorder %v559, %v505
      %vm581 = vcmp.eq.s32.totalorder %v562, %v505
      %vm582 = vcmp.eq.s32.totalorder %v565, %v505
      %vm583 = vcmp.eq.s32.totalorder %v568, %v505
      %vm584 = vcmp.eq.s32.totalorder %v571, %v505
      %vm585 = vcmp.eq.s32.totalorder %v574, %v505
      %vm586 = vcmp.eq.s32.totalorder %v577, %v505
      %v587 = vsel %vm533, 1.0, 0.0
      %v588 = vsel %vm534, 1.0, 0.0
      %v589 = vsel %vm535, 1.0, 0.0
      %v590 = vsel %vm536, 1.0, 0.0
      %v591 = vsel %vm537, 1.0, 0.0
      %v592 = vsel %vm538, 1.0, 0.0
      %v593 = vsel %vm539, 1.0, 0.0
      %v594 = vsel %vm540, 1.0, 0.0
      %v595 = vsel %vm541, 1.0, 0.0
      %v596 = vpack.c.bf16 %v588, %v587
      %v597 = vpack.c.bf16 %v590, %v589
      %v598 = vpack.c.bf16 %v592, %v591
      %v599 = vpack.c.bf16 %v594, %v593
      %v600 = vpack.c.bf16 %v595, %v595
      %v601 = vsel %vm578, 1.0, 0.0
      %v602 = vsel %vm579, 1.0, 0.0
      %v603 = vsel %vm580, 1.0, 0.0
      %v604 = vsel %vm581, 1.0, 0.0
      %v605 = vsel %vm582, 1.0, 0.0
      %v606 = vsel %vm583, 1.0, 0.0
      %v607 = vsel %vm584, 1.0, 0.0
      %v608 = vsel %vm585, 1.0, 0.0
      %v609 = vsel %vm586, 1.0, 0.0
      %v610 = vpack.c.bf16 %v602, %v601
      %v611 = vpack.c.bf16 %v604, %v603
      %v612 = vpack.c.bf16 %v606, %v605
      %v613 = vpack.c.bf16 %v608, %v607
      %v614 = vpack.c.bf16 %v609, %v609
      %v615 = vld [vmem:[%s2] sm:$0xf]
      %v616 = vld [vmem:[%s2 + $0x4] sm:$0xf]
      %v619 = vunpack.c.l.b16 %v615
      %v620 = vunpack.c.l.b16 %v616
      %v621 = vpack.c.b16 %v620, %v619
      %vm623 = vcmask 130048
      %v625 = vsel %vm623, %v596, 0
      %v628 = vsel %vm623, %v597, 0
      %v631 = vsel %vm623, %v598, 0
      %v634 = vsel %vm623, %v599, 0
      %v637 = vsel %vm623, %v600, 0
      %639 = vmatprep.subr.bf16.mxu0 0
      %640 = vmatpush1.bf16.msra.mxu0 %v621
      %641 = vmatprep.subr.bf16.mxu0 0
      %642 = vmatpush1.bf16.msra.mxu0 0
      %643 = vmatprep.subr.bf16.mxu0 0
      %644 = vmatpush1.bf16.msra.mxu0 0
      %645 = vmatprep.subr.bf16.mxu0 0
      %646 = vmatpush1.bf16.msra.mxu0 0
      %647 = vmatprep.subr.bf16.mxu0 0
      %648 = vmatpush1.bf16.msra.mxu0 0
      %649 = vmatprep.subr.bf16.mxu0 0
      %650 = vmatpush1.bf16.msra.mxu0 0
      %651 = vmatprep.subr.bf16.mxu0 0
      %652 = vmatpush1.bf16.msra.mxu0 0
      %653 = vmatprep.subr.bf16.mxu0 0
      %654 = vmatpush1.bf16.msra.mxu0 0
      %655 = vmatprep.subr.bf16.mxu0 0
      %656 = vmatpush1.bf16.msra.mxu0 0
      %657 = vmatprep.subr.bf16.mxu0 0
      %658 = vmatpush1.bf16.msra.mxu0 0
      %659 = vmatprep.subr.bf16.mxu0 0
      %660 = vmatpush1.bf16.msra.mxu0 0
      %661 = vmatprep.subr.bf16.mxu0 0
      %662 = vmatpush1.bf16.msra.mxu0 0
      %663 = vmatprep.subr.bf16.mxu0 0
      %664 = vmatpush1.bf16.msra.mxu0 0
      %665 = vmatprep.subr.bf16.mxu0 0
      %666 = vmatpush1.bf16.msra.mxu0 0
      %667 = vmatprep.subr.bf16.mxu0 0
      %668 = vmatpush1.bf16.msra.mxu0 0
      %669 = vmatprep.subr.bf16.mxu0 0
      %670 = vmatpush1.bf16.msra.mxu0 0
      %671 = vmatprep.mubr.bf16.mxu0 0
      %672 = vmatmul.mubr.bf16.gmra.mrb[0].mxu0 %v625
      %v673 = vpop.f32.mrb[0].mxu0
      %v674 = vadd.f32 0.0, %v673
      %v675 = vpop.f32.mrb[0].mxu0
      %v676 = vpop.f32.mrb[0].mxu0
      %v677 = vadd.f32 0.0, %v676
      %v678 = vpop.f32.mrb[0].mxu0
      %679 = vmatprep.mubr.bf16.mxu0 0
      %680 = vmatmul.mubr.bf16.gmra.mrb[0].mxu0 %v628
      %v681 = vpop.f32.mrb[0].mxu0
      %v682 = vadd.f32 0.0, %v681
      %v683 = vpop.f32.mrb[0].mxu0
      %v684 = vpop.f32.mrb[0].mxu0
      %v685 = vadd.f32 0.0, %v684
      %v686 = vpop.f32.mrb[0].mxu0
      %687 = vmatprep.mubr.bf16.mxu0 0
      %688 = vmatmul.mubr.bf16.gmra.mrb[0].mxu0 %v631
      %v689 = vpop.f32.mrb[0].mxu0
      %v690 = vadd.f32 0.0, %v689
      %v691 = vpop.f32.mrb[0].mxu0
      %v692 = vpop.f32.mrb[0].mxu0
      %v693 = vadd.f32 0.0, %v692
      %v694 = vpop.f32.mrb[0].mxu0
      %695 = vmatprep.mubr.bf16.mxu0 0
      %696 = vmatmul.mubr.bf16.gmra.mrb[0].mxu0 %v634
      %v697 = vpop.f32.mrb[0].mxu0
      %v698 = vadd.f32 0.0, %v697
      %v699 = vpop.f32.mrb[0].mxu0
      %v700 = vpop.f32.mrb[0].mxu0
      %v701 = vadd.f32 0.0, %v700
      %v702 = vpop.f32.mrb[0].mxu0
      %703 = vmatprep.mubr.bf16.mxu0 0
      %704 = vmatmul.mubr.bf16.gmra.mrb[0].mxu0 %v637
      %v705 = vpop.f32.mrb[0].mxu0
      %v706 = vadd.f32 0.0, %v705
      %v707 = vpop.f32.mrb[0].mxu0
      %v708 = vpop.f32.mrb[0].mxu0
      %v709 = vpop.f32.mrb[0].mxu0
      %710 = vdwg.mxu0
      %v711 = vld [vmem:[%s3] sm:$0xf]
      %v712 = vld [vmem:[%s3 + $0x4] sm:$0xf]
      %v715 = vunpack.c.l.b16 %v711
      %v716 = vunpack.c.l.b16 %v712
      %v717 = vpack.c.b16 %v716, %v715
      %v720 = vsel %vm623, %v610, 0
      %v723 = vsel %vm623, %v611, 0
      %v726 = vsel %vm623, %v612, 0
      %v729 = vsel %vm623, %v613, 0
      %v732 = vsel %vm623, %v614, 0
      %734 = vmatprep.subr.bf16.mxu0 0
      %735 = vmatpush1.bf16.msra.mxu0 %v717
      %736 = vmatprep.subr.bf16.mxu0 0
      %737 = vmatpush1.bf16.msra.mxu0 0
      %738 = vmatprep.subr.bf16.mxu0 0
      %739 = vmatpush1.bf16.msra.mxu0 0
      %740 = vmatprep.subr.bf16.mxu0 0
      %741 = vmatpush1.bf16.msra.mxu0 0
      %742 = vmatprep.subr.bf16.mxu0 0
      %743 = vmatpush1.bf16.msra.mxu0 0
      %744 = vmatprep.subr.bf16.mxu0 0
      %745 = vmatpush1.bf16.msra.mxu0 0
      %746 = vmatprep.subr.bf16.mxu0 0
      %747 = vmatpush1.bf16.msra.mxu0 0
      %748 = vmatprep.subr.bf16.mxu0 0
      %749 = vmatpush1.bf16.msra.mxu0 0
      %750 = vmatprep.subr.bf16.mxu0 0
      %751 = vmatpush1.bf16.msra.mxu0 0
      %752 = vmatprep.subr.bf16.mxu0 0
      %753 = vmatpush1.bf16.msra.mxu0 0
      %754 = vmatprep.subr.bf16.mxu0 0
      %755 = vmatpush1.bf16.msra.mxu0 0
      %756 = vmatprep.subr.bf16.mxu0 0
      %757 = vmatpush1.bf16.msra.mxu0 0
      %758 = vmatprep.subr.bf16.mxu0 0
      %759 = vmatpush1.bf16.msra.mxu0 0
      %760 = vmatprep.subr.bf16.mxu0 0
      %761 = vmatpush1.bf16.msra.mxu0 0
      %762 = vmatprep.subr.bf16.mxu0 0
      %763 = vmatpush1.bf16.msra.mxu0 0
      %764 = vmatprep.subr.bf16.mxu0 0
      %765 = vmatpush1.bf16.msra.mxu0 0
      %766 = vmatprep.mubr.bf16.mxu0 0
      %767 = vmatmul.mubr.bf16.gmra.mrb[0].mxu0 %v720
      %v768 = vpop.f32.mrb[0].mxu0
      %v769 = vadd.f32 0.0, %v768
      %v770 = vpop.f32.mrb[0].mxu0
      %v771 = vpop.f32.mrb[0].mxu0
      %v772 = vadd.f32 0.0, %v771
      %v773 = vpop.f32.mrb[0].mxu0
      %774 = vmatprep.mubr.bf16.mxu0 0
      %775 = vmatmul.mubr.bf16.gmra.mrb[0].mxu0 %v723
      %v776 = vpop.f32.mrb[0].mxu0
      %v777 = vadd.f32 0.0, %v776
      %v778 = vpop.f32.mrb[0].mxu0
      %v779 = vpop.f32.mrb[0].mxu0
      %v780 = vadd.f32 0.0, %v779
      %v781 = vpop.f32.mrb[0].mxu0
      %782 = vmatprep.mubr.bf16.mxu0 0
      %783 = vmatmul.mubr.bf16.gmra.mrb[0].mxu0 %v726
      %v784 = vpop.f32.mrb[0].mxu0
      %v785 = vadd.f32 0.0, %v784
      %v786 = vpop.f32.mrb[0].mxu0
      %v787 = vpop.f32.mrb[0].mxu0
      %v788 = vadd.f32 0.0, %v787
      %v789 = vpop.f32.mrb[0].mxu0
      %790 = vmatprep.mubr.bf16.mxu0 0
      %791 = vmatmul.mubr.bf16.gmra.mrb[0].mxu0 %v729
      %v792 = vpop.f32.mrb[0].mxu0
      %v793 = vadd.f32 0.0, %v792
      %v794 = vpop.f32.mrb[0].mxu0
      %v795 = vpop.f32.mrb[0].mxu0
      %v796 = vadd.f32 0.0, %v795
      %v797 = vpop.f32.mrb[0].mxu0
      %798 = vmatprep.mubr.bf16.mxu0 0
      %799 = vmatmul.mubr.bf16.gmra.mrb[0].mxu0 %v732
      %v800 = vpop.f32.mrb[0].mxu0
      %v801 = vadd.f32 0.0, %v800
      %v802 = vpop.f32.mrb[0].mxu0
      %v803 = vpop.f32.mrb[0].mxu0
      %v804 = vpop.f32.mrb[0].mxu0
      %805 = vdwg.mxu0
      %v806 = vpack.c.bf16 %v677, %v674
      %v807 = vpack.c.bf16 %v685, %v682
      %v808 = vpack.c.bf16 %v693, %v690
      %v809 = vpack.c.bf16 %v701, %v698
      %v810 = vpack.c.bf16 %v706, %v706
      %v811 = vpack.c.bf16 %v772, %v769
      %v812 = vpack.c.bf16 %v780, %v777
      %v813 = vpack.c.bf16 %v788, %v785
      %v814 = vpack.c.bf16 %v796, %v793
      %v815 = vpack.c.bf16 %v801, %v801
      %v816 = vld [vmem:[%s4] sm:$0xf]
      %v817 = vld [vmem:[%s4 + $0x4] sm:$0xf]
      %v818 = vld [vmem:[%s4 + $0x8] sm:$0xf]
      %v819 = vld [vmem:[%s4 + $0xc] sm:$0xf]
      %v820 = vld [vmem:[%s5] sm:$0xf]
      %v821 = vld [vmem:[%s5 + $0x4] sm:$0xf]
      %v822 = vld [vmem:[%s5 + $0x8] sm:$0xf]
      %v823 = vld [vmem:[%s5 + $0xc] sm:$0xf]
      %v828 = vunpack.c.l.b16 %v820
      %v829 = vunpack.c.l.b16 %v821
      %v830 = vunpack.c.l.b16 %v822
      %v831 = vunpack.c.l.b16 %v823
      %v832 = vpack.c.b16 %v829, %v828
      %v833 = vpack.c.b16 %v831, %v830
      %vm836 = vcmask 261120
      %v838 = vsel %vm836, %v811, 0
      %v841 = vsel %vm836, %v812, 0
      %v844 = vsel %vm836, %v813, 0
      %v847 = vsel %vm836, %v814, 0
      %v850 = vsel %vm836, %v815, 0
      %852 = vmatprep.subr.bf16.mxu0 0
      %853 = vmatpush1.bf16.msra.mxu0 %v832
      %854 = vmatprep.subr.bf16.mxu0 0
      %855 = vmatpush1.bf16.msra.mxu0 %v833
      %856 = vmatprep.subr.bf16.mxu0 0
      %857 = vmatpush1.bf16.msra.mxu0 0
      %858 = vmatprep.subr.bf16.mxu0 0
      %859 = vmatpush1.bf16.msra.mxu0 0
      %860 = vmatprep.subr.bf16.mxu0 0
      %861 = vmatpush1.bf16.msra.mxu0 0
      %862 = vmatprep.subr.bf16.mxu0 0
      %863 = vmatpush1.bf16.msra.mxu0 0
      %864 = vmatprep.subr.bf16.mxu0 0
      %865 = vmatpush1.bf16.msra.mxu0 0
      %866 = vmatprep.subr.bf16.mxu0 0
      %867 = vmatpush1.bf16.msra.mxu0 0
      %868 = vmatprep.subr.bf16.mxu0 0
      %869 = vmatpush1.bf16.msra.mxu0 0
      %870 = vmatprep.subr.bf16.mxu0 0
      %871 = vmatpush1.bf16.msra.mxu0 0
      %872 = vmatprep.subr.bf16.mxu0 0
      %873 = vmatpush1.bf16.msra.mxu0 0
      %874 = vmatprep.subr.bf16.mxu0 0
      %875 = vmatpush1.bf16.msra.mxu0 0
      %876 = vmatprep.subr.bf16.mxu0 0
      %877 = vmatpush1.bf16.msra.mxu0 0
      %878 = vmatprep.subr.bf16.mxu0 0
      %879 = vmatpush1.bf16.msra.mxu0 0
      %880 = vmatprep.subr.bf16.mxu0 0
      %881 = vmatpush1.bf16.msra.mxu0 0
      %882 = vmatprep.subr.bf16.mxu0 0
      %883 = vmatpush1.bf16.msra.mxu0 0
      %884 = vmatprep.mubr.bf16.mxu0 0
      %885 = vmatmul.mubr.bf16.gmra.mrb[0].mxu0 %v838
      %v886 = vpop.f32.mrb[0].mxu0
      %v887 = vadd.f32 0.0, %v886
      %v888 = vpop.f32.mrb[0].mxu0
      %v889 = vpop.f32.mrb[0].mxu0
      %v890 = vadd.f32 0.0, %v889
      %v891 = vpop.f32.mrb[0].mxu0
      %892 = vmatprep.mubr.bf16.mxu0 0
      %893 = vmatmul.mubr.bf16.gmra.mrb[0].mxu0 %v841
      %v894 = vpop.f32.mrb[0].mxu0
      %v895 = vadd.f32 0.0, %v894
      %v896 = vpop.f32.mrb[0].mxu0
      %v897 = vpop.f32.mrb[0].mxu0
      %v898 = vadd.f32 0.0, %v897
      %v899 = vpop.f32.mrb[0].mxu0
      %900 = vmatprep.mubr.bf16.mxu0 0
      %901 = vmatmul.mubr.bf16.gmra.mrb[0].mxu0 %v844
      %v902 = vpop.f32.mrb[0].mxu0
      %v903 = vadd.f32 0.0, %v902
      %v904 = vpop.f32.mrb[0].mxu0
      %v905 = vpop.f32.mrb[0].mxu0
      %v906 = vadd.f32 0.0, %v905
      %v907 = vpop.f32.mrb[0].mxu0
      %908 = vmatprep.mubr.bf16.mxu0 0
      %909 = vmatmul.mubr.bf16.gmra.mrb[0].mxu0 %v847
      %v910 = vpop.f32.mrb[0].mxu0
      %v911 = vadd.f32 0.0, %v910
      %v912 = vpop.f32.mrb[0].mxu0
      %v913 = vpop.f32.mrb[0].mxu0
      %v914 = vadd.f32 0.0, %v913
      %v915 = vpop.f32.mrb[0].mxu0
      %916 = vmatprep.mubr.bf16.mxu0 0
      %917 = vmatmul.mubr.bf16.gmra.mrb[0].mxu0 %v850
      %v918 = vpop.f32.mrb[0].mxu0
      %v919 = vadd.f32 0.0, %v918
      %v920 = vpop.f32.mrb[0].mxu0
      %v921 = vpop.f32.mrb[0].mxu0
      %v922 = vpop.f32.mrb[0].mxu0
      %923 = vdwg.mxu0
      %v928 = vunpack.c.l.b16 %v816
      %v929 = vunpack.c.l.b16 %v817
      %v930 = vunpack.c.l.b16 %v818
      %v931 = vunpack.c.l.b16 %v819
      %v932 = vpack.c.b16 %v929, %v928
      %v933 = vpack.c.b16 %v931, %v930
      %v937 = vsel %vm836, %v806, 0
      %v940 = vsel %vm836, %v807, 0
      %v943 = vsel %vm836, %v808, 0
      %v946 = vsel %vm836, %v809, 0
      %v949 = vsel %vm836, %v810, 0
      %951 = vmatprep.subr.bf16.mxu0 0
      %952 = vmatpush1.bf16.msra.mxu0 %v932
      %953 = vmatprep.subr.bf16.mxu0 0
      %954 = vmatpush1.bf16.msra.mxu0 %v933
      %955 = vmatprep.subr.bf16.mxu0 0
      %956 = vmatpush1.bf16.msra.mxu0 0
      %957 = vmatprep.subr.bf16.mxu0 0
      %958 = vmatpush1.bf16.msra.mxu0 0
      %959 = vmatprep.subr.bf16.mxu0 0
      %960 = vmatpush1.bf16.msra.mxu0 0
      %961 = vmatprep.subr.bf16.mxu0 0
      %962 = vmatpush1.bf16.msra.mxu0 0
      %963 = vmatprep.subr.bf16.mxu0 0
      %964 = vmatpush1.bf16.msra.mxu0 0
      %965 = vmatprep.subr.bf16.mxu0 0
      %966 = vmatpush1.bf16.msra.mxu0 0
      %967 = vmatprep.subr.bf16.mxu0 0
      %968 = vmatpush1.bf16.msra.mxu0 0
      %969 = vmatprep.subr.bf16.mxu0 0
      %970 = vmatpush1.bf16.msra.mxu0 0
      %971 = vmatprep.subr.bf16.mxu0 0
      %972 = vmatpush1.bf16.msra.mxu0 0
      %973 = vmatprep.subr.bf16.mxu0 0
      %974 = vmatpush1.bf16.msra.mxu0 0
      %975 = vmatprep.subr.bf16.mxu0 0
      %976 = vmatpush1.bf16.msra.mxu0 0
      %977 = vmatprep.subr.bf16.mxu0 0
      %978 = vmatpush1.bf16.msra.mxu0 0
      %979 = vmatprep.subr.bf16.mxu0 0
      %980 = vmatpush1.bf16.msra.mxu0 0
      %981 = vmatprep.subr.bf16.mxu0 0
      %982 = vmatpush1.bf16.msra.mxu0 0
      %983 = vmatprep.mubr.bf16.mxu0 0
      %984 = vmatmul.mubr.bf16.gmra.mrb[0].mxu0 %v937
      %v985 = vpop.f32.mrb[0].mxu0
      %v986 = vadd.f32 %v887, %v985
      %v987 = vpop.f32.mrb[0].mxu0
      %v988 = vpop.f32.mrb[0].mxu0
      %v989 = vadd.f32 %v890, %v988
      %v990 = vpop.f32.mrb[0].mxu0
      %991 = vmatprep.mubr.bf16.mxu0 0
      %992 = vmatmul.mubr.bf16.gmra.mrb[0].mxu0 %v940
      %v993 = vpop.f32.mrb[0].mxu0
      %v994 = vadd.f32 %v895, %v993
      %v995 = vpop.f32.mrb[0].mxu0
      %v996 = vpop.f32.mrb[0].mxu0
      %v997 = vadd.f32 %v898, %v996
      %v998 = vpop.f32.mrb[0].mxu0
      %999 = vmatprep.mubr.bf16.mxu0 0
      %1000 = vmatmul.mubr.bf16.gmra.mrb[0].mxu0 %v943
      %v1001 = vpop.f32.mrb[0].mxu0
      %v1002 = vadd.f32 %v903, %v1001
      %v1003 = vpop.f32.mrb[0].mxu0
      %v1004 = vpop.f32.mrb[0].mxu0
      %v1005 = vadd.f32 %v906, %v1004
      %v1006 = vpop.f32.mrb[0].mxu0
      %1007 = vmatprep.mubr.bf16.mxu0 0
      %1008 = vmatmul.mubr.bf16.gmra.mrb[0].mxu0 %v946
      %v1009 = vpop.f32.mrb[0].mxu0
      %v1010 = vadd.f32 %v911, %v1009
      %v1011 = vpop.f32.mrb[0].mxu0
      %v1012 = vpop.f32.mrb[0].mxu0
      %v1013 = vadd.f32 %v914, %v1012
      %v1014 = vpop.f32.mrb[0].mxu0
      %1015 = vmatprep.mubr.bf16.mxu0 0
      %1016 = vmatmul.mubr.bf16.gmra.mrb[0].mxu0 %v949
      %v1017 = vpop.f32.mrb[0].mxu0
      %v1018 = vadd.f32 %v919, %v1017
      %v1019 = vpop.f32.mrb[0].mxu0
      %v1020 = vpop.f32.mrb[0].mxu0
      %v1021 = vpop.f32.mrb[0].mxu0
      %1022 = vdwg.mxu0
      %v1023 = vld [vmem:[%s6] sm:$0x1]
      %v1025 = vlaneseq
      %v1026 = vshrl.u32 %v1025, 7
      %v1027 = vsub.s32 0, %v1026
      %v1028 = vrot.slane %v1023, %v1027
      %v1030 = vadd.f32 %v986, %v1028
      %v1031 = vadd.f32 %v989, %v1028
      %v1032 = vadd.f32 %v994, %v1028
      %v1033 = vadd.f32 %v997, %v1028
      %v1034 = vadd.f32 %v1002, %v1028
      %v1035 = vadd.f32 %v1005, %v1028
      %v1036 = vadd.f32 %v1010, %v1028
      %v1037 = vadd.f32 %v1013, %v1028
      %v1038 = vadd.f32 %v1018, %v1028
      %v1039 = vxor.u32 %v1030, 2147483648
      %v1040 = vxor.u32 %v1031, 2147483648
      %v1041 = vxor.u32 %v1032, 2147483648
      %v1042 = vxor.u32 %v1033, 2147483648
      %v1043 = vxor.u32 %v1034, 2147483648
      %v1044 = vxor.u32 %v1035, 2147483648
      %v1045 = vxor.u32 %v1036, 2147483648
      %v1046 = vxor.u32 %v1037, 2147483648
      %v1047 = vxor.u32 %v1038, 2147483648
      %v1048 = vmul.f32 %v1039, 1.442695
      %v1049 = vpow.pop %v1048
      %v1050 = vmul.f32 %v1040, 1.442695
      %v1051 = vpow.pop %v1050
      %v1052 = vmul.f32 %v1041, 1.442695
      %v1053 = vpow.pop %v1052
      %v1054 = vmul.f32 %v1042, 1.442695
      %v1055 = vpow.pop %v1054
      %v1056 = vmul.f32 %v1043, 1.442695
      %v1057 = vpow.pop %v1056
      %v1058 = vmul.f32 %v1044, 1.442695
      %v1059 = vpow.pop %v1058
      %v1060 = vmul.f32 %v1045, 1.442695
      %v1061 = vpow.pop %v1060
      %v1062 = vmul.f32 %v1046, 1.442695
      %v1063 = vpow.pop %v1062
      %v1064 = vmul.f32 %v1047, 1.442695
      %v1065 = vpow.pop %v1064
      %v1066 = vadd.f32 %v1049, 1.0
      %v1067 = vadd.f32 %v1051, 1.0
      %v1068 = vadd.f32 %v1053, 1.0
      %v1069 = vadd.f32 %v1055, 1.0
      %v1070 = vadd.f32 %v1057, 1.0
      %v1071 = vadd.f32 %v1059, 1.0
      %v1072 = vadd.f32 %v1061, 1.0
      %v1073 = vadd.f32 %v1063, 1.0
      %v1074 = vadd.f32 %v1065, 1.0
      %v1075 = vrcp.pop %v1066
      %v1076 = vmul.f32 1.0, %v1075
      %v1077 = vrcp.pop %v1067
      %v1078 = vmul.f32 1.0, %v1077
      %v1079 = vrcp.pop %v1068
      %v1080 = vmul.f32 1.0, %v1079
      %v1081 = vrcp.pop %v1069
      %v1082 = vmul.f32 1.0, %v1081
      %v1083 = vrcp.pop %v1070
      %v1084 = vmul.f32 1.0, %v1083
      %v1085 = vrcp.pop %v1071
      %v1086 = vmul.f32 1.0, %v1085
      %v1087 = vrcp.pop %v1072
      %v1088 = vmul.f32 1.0, %v1087
      %v1089 = vrcp.pop %v1073
      %v1090 = vmul.f32 1.0, %v1089
      %v1091 = vrcp.pop %v1074
      %v1092 = vmul.f32 1.0, %v1091
      %v1093 = vmul.f32 %v1076, %v674
      %v1094 = vmul.f32 %v1078, %v677
      %v1095 = vmul.f32 %v1080, %v682
      %v1096 = vmul.f32 %v1082, %v685
      %v1097 = vmul.f32 %v1084, %v690
      %v1098 = vmul.f32 %v1086, %v693
      %v1099 = vmul.f32 %v1088, %v698
      %v1100 = vmul.f32 %v1090, %v701
      %v1101 = vmul.f32 %v1092, %v706
      %1111 = vrot.lane.b32.xlu0 %v769, 32
      %v1112 = vpop.permute.xlu0 %1111
      %1113 = vrot.lane.b32.xlu0 %v772, 32
      %v1114 = vpop.permute.xlu0 %1113
      %1115 = vrot.lane.b32.xlu0 %v777, 32
      %v1116 = vpop.permute.xlu0 %1115
      %1117 = vrot.lane.b32.xlu0 %v780, 32
      %v1118 = vpop.permute.xlu0 %1117
      %1119 = vrot.lane.b32.xlu0 %v785, 32
      %v1120 = vpop.permute.xlu0 %1119
      %1121 = vrot.lane.b32.xlu0 %v788, 32
      %v1122 = vpop.permute.xlu0 %1121
      %1123 = vrot.lane.b32.xlu0 %v793, 32
      %v1124 = vpop.permute.xlu0 %1123
      %1125 = vrot.lane.b32.xlu0 %v796, 32
      %v1126 = vpop.permute.xlu0 %1125
      %1127 = vrot.lane.b32.xlu0 %v801, 32
      %v1128 = vpop.permute.xlu0 %1127
      %v1138 = vmul.f32 %v1076, %v1112
      %v1139 = vmul.f32 %v1078, %v1114
      %v1140 = vmul.f32 %v1080, %v1116
      %v1141 = vmul.f32 %v1082, %v1118
      %v1142 = vmul.f32 %v1084, %v1120
      %v1143 = vmul.f32 %v1086, %v1122
      %v1144 = vmul.f32 %v1088, %v1124
      %v1145 = vmul.f32 %v1090, %v1126
      %v1146 = vmul.f32 %v1092, %v1128
      %1147 = vrot.lane.b32.xlu0 %v769, 64
      %v1148 = vpop.permute.xlu0 %1147
      %1149 = vrot.lane.b32.xlu0 %v772, 64
      %v1150 = vpop.permute.xlu0 %1149
      %1151 = vrot.lane.b32.xlu0 %v777, 64
      %v1152 = vpop.permute.xlu0 %1151
      %1153 = vrot.lane.b32.xlu0 %v780, 64
      %v1154 = vpop.permute.xlu0 %1153
      %1155 = vrot.lane.b32.xlu0 %v785, 64
      %v1156 = vpop.permute.xlu0 %1155
      %1157 = vrot.lane.b32.xlu0 %v788, 64
      %v1158 = vpop.permute.xlu0 %1157
      %1159 = vrot.lane.b32.xlu0 %v793, 64
      %v1160 = vpop.permute.xlu0 %1159
      %1161 = vrot.lane.b32.xlu0 %v796, 64
      %v1162 = vpop.permute.xlu0 %1161
      %1163 = vrot.lane.b32.xlu0 %v801, 64
      %v1164 = vpop.permute.xlu0 %1163
      %v1174 = vmul.f32 %v1030, %v1148
      %v1175 = vmul.f32 %v1031, %v1150
      %v1176 = vmul.f32 %v1032, %v1152
      %v1177 = vmul.f32 %v1033, %v1154
      %v1178 = vmul.f32 %v1034, %v1156
      %v1179 = vmul.f32 %v1035, %v1158
      %v1180 = vmul.f32 %v1036, %v1160
      %v1181 = vmul.f32 %v1037, %v1162
      %v1182 = vmul.f32 %v1038, %v1164
      %v1183 = vpack.c.bf16 %v1094, %v1093
      %v1184 = vpack.c.bf16 %v1096, %v1095
      %v1185 = vpack.c.bf16 %v1098, %v1097
      %v1186 = vpack.c.bf16 %v1100, %v1099
      %v1187 = vpack.c.bf16 %v1101, %v1101
      %v1188 = vld [vmem:[%s7] sm:$0xf]
      %v1189 = vld [vmem:[%s7 + $0x4] sm:$0xf]
      %v1190 = vld [vmem:[%s7 + $0x8] sm:$0xf]
      %v1191 = vld [vmem:[%s7 + $0xc] sm:$0xf]
      %v1192 = vpack.c.bf16 %v1139, %v1138
      %v1193 = vpack.c.bf16 %v1141, %v1140
      %v1194 = vpack.c.bf16 %v1143, %v1142
      %v1195 = vpack.c.bf16 %v1145, %v1144
      %v1196 = vpack.c.bf16 %v1146, %v1146
      %v1197 = vld [vmem:[%s8] sm:$0xf]
      %v1198 = vld [vmem:[%s8 + $0x4] sm:$0xf]
      %v1199 = vld [vmem:[%s8 + $0x8] sm:$0xf]
      %v1200 = vld [vmem:[%s8 + $0xc] sm:$0xf]
      %1206 = vrot.lane.b32.xlu0 %v1192, 96
      %v1207 = vpop.permute.xlu0 %1206
      %1208 = vrot.lane.b32.xlu0 %v1193, 96
      %v1209 = vpop.permute.xlu0 %1208
      %1210 = vrot.lane.b32.xlu0 %v1194, 96
      %v1211 = vpop.permute.xlu0 %1210
      %1212 = vrot.lane.b32.xlu0 %v1195, 96
      %v1213 = vpop.permute.xlu0 %1212
      %1214 = vrot.lane.b32.xlu0 %v1196, 96
      %v1215 = vpop.permute.xlu0 %1214
      %v1220 = vunpack.c.l.b16 %v1197
      %v1221 = vunpack.c.l.b16 %v1198
      %v1222 = vunpack.c.l.b16 %v1199
      %v1223 = vunpack.c.l.b16 %v1200
      %v1224 = vpack.c.b16 %v1221, %v1220
      %v1225 = vpack.c.b16 %v1223, %v1222
      %v1229 = vsel %vm836, %v1207, 0
      %v1232 = vsel %vm836, %v1209, 0
      %v1235 = vsel %vm836, %v1211, 0
      %v1238 = vsel %vm836, %v1213, 0
      %v1241 = vsel %vm836, %v1215, 0
      %1243 = vmatprep.subr.bf16.mxu0 0
      %1244 = vmatpush1.bf16.msra.mxu0 %v1224
      %1245 = vmatprep.subr.bf16.mxu0 0
      %1246 = vmatpush1.bf16.msra.mxu0 %v1225
      %1247 = vmatprep.subr.bf16.mxu0 0
      %1248 = vmatpush1.bf16.msra.mxu0 0
      %1249 = vmatprep.subr.bf16.mxu0 0
      %1250 = vmatpush1.bf16.msra.mxu0 0
      %1251 = vmatprep.subr.bf16.mxu0 0
      %1252 = vmatpush1.bf16.msra.mxu0 0
      %1253 = vmatprep.subr.bf16.mxu0 0
      %1254 = vmatpush1.bf16.msra.mxu0 0
      %1255 = vmatprep.subr.bf16.mxu0 0
      %1256 = vmatpush1.bf16.msra.mxu0 0
      %1257 = vmatprep.subr.bf16.mxu0 0
      %1258 = vmatpush1.bf16.msra.mxu0 0
      %1259 = vmatprep.subr.bf16.mxu0 0
      %1260 = vmatpush1.bf16.msra.mxu0 0
      %1261 = vmatprep.subr.bf16.mxu0 0
      %1262 = vmatpush1.bf16.msra.mxu0 0
      %1263 = vmatprep.subr.bf16.mxu0 0
      %1264 = vmatpush1.bf16.msra.mxu0 0
      %1265 = vmatprep.subr.bf16.mxu0 0
      %1266 = vmatpush1.bf16.msra.mxu0 0
      %1267 = vmatprep.subr.bf16.mxu0 0
      %1268 = vmatpush1.bf16.msra.mxu0 0
      %1269 = vmatprep.subr.bf16.mxu0 0
      %1270 = vmatpush1.bf16.msra.mxu0 0
      %1271 = vmatprep.subr.bf16.mxu0 0
      %1272 = vmatpush1.bf16.msra.mxu0 0
      %1273 = vmatprep.subr.bf16.mxu0 0
      %1274 = vmatpush1.bf16.msra.mxu0 0
      %1275 = vmatprep.mubr.bf16.mxu0 0
      %1276 = vmatmul.mubr.bf16.gmra.mrb[0].mxu0 %v1229
      %v1277 = vpop.f32.mrb[0].mxu0
      %v1278 = vadd.f32 0.0, %v1277
      %v1279 = vpop.f32.mrb[0].mxu0
      %v1280 = vpop.f32.mrb[0].mxu0
      %v1281 = vadd.f32 0.0, %v1280
      %v1282 = vpop.f32.mrb[0].mxu0
      %1283 = vmatprep.mubr.bf16.mxu0 0
      %1284 = vmatmul.mubr.bf16.gmra.mrb[0].mxu0 %v1232
      %v1285 = vpop.f32.mrb[0].mxu0
      %v1286 = vadd.f32 0.0, %v1285
      %v1287 = vpop.f32.mrb[0].mxu0
      %v1288 = vpop.f32.mrb[0].mxu0
      %v1289 = vadd.f32 0.0, %v1288
      %v1290 = vpop.f32.mrb[0].mxu0
      %1291 = vmatprep.mubr.bf16.mxu0 0
      %1292 = vmatmul.mubr.bf16.gmra.mrb[0].mxu0 %v1235
      %v1293 = vpop.f32.mrb[0].mxu0
      %v1294 = vadd.f32 0.0, %v1293
      %v1295 = vpop.f32.mrb[0].mxu0
      %v1296 = vpop.f32.mrb[0].mxu0
      %v1297 = vadd.f32 0.0, %v1296
      %v1298 = vpop.f32.mrb[0].mxu0
      %1299 = vmatprep.mubr.bf16.mxu0 0
      %1300 = vmatmul.mubr.bf16.gmra.mrb[0].mxu0 %v1238
      %v1301 = vpop.f32.mrb[0].mxu0
      %v1302 = vadd.f32 0.0, %v1301
      %v1303 = vpop.f32.mrb[0].mxu0
      %v1304 = vpop.f32.mrb[0].mxu0
      %v1305 = vadd.f32 0.0, %v1304
      %v1306 = vpop.f32.mrb[0].mxu0
      %1307 = vmatprep.mubr.bf16.mxu0 0
      %1308 = vmatmul.mubr.bf16.gmra.mrb[0].mxu0 %v1241
      %v1309 = vpop.f32.mrb[0].mxu0
      %v1310 = vadd.f32 0.0, %v1309
      %v1311 = vpop.f32.mrb[0].mxu0
      %v1312 = vpop.f32.mrb[0].mxu0
      %v1313 = vpop.f32.mrb[0].mxu0
      %1314 = vdwg.mxu0
      %v1319 = vunpack.c.l.b16 %v1188
      %v1320 = vunpack.c.l.b16 %v1189
      %v1321 = vunpack.c.l.b16 %v1190
      %v1322 = vunpack.c.l.b16 %v1191
      %v1323 = vpack.c.b16 %v1320, %v1319
      %v1324 = vpack.c.b16 %v1322, %v1321
      %v1328 = vsel %vm836, %v1183, 0
      %v1331 = vsel %vm836, %v1184, 0
      %v1334 = vsel %vm836, %v1185, 0
      %v1337 = vsel %vm836, %v1186, 0
      %v1340 = vsel %vm836, %v1187, 0
      %1342 = vmatprep.subr.bf16.mxu0 0
      %1343 = vmatpush1.bf16.msra.mxu0 %v1323
      %1344 = vmatprep.subr.bf16.mxu0 0
      %1345 = vmatpush1.bf16.msra.mxu0 %v1324
      %1346 = vmatprep.subr.bf16.mxu0 0
      %1347 = vmatpush1.bf16.msra.mxu0 0
      %1348 = vmatprep.subr.bf16.mxu0 0
      %1349 = vmatpush1.bf16.msra.mxu0 0
      %1350 = vmatprep.subr.bf16.mxu0 0
      %1351 = vmatpush1.bf16.msra.mxu0 0
      %1352 = vmatprep.subr.bf16.mxu0 0
      %1353 = vmatpush1.bf16.msra.mxu0 0
      %1354 = vmatprep.subr.bf16.mxu0 0
      %1355 = vmatpush1.bf16.msra.mxu0 0
      %1356 = vmatprep.subr.bf16.mxu0 0
      %1357 = vmatpush1.bf16.msra.mxu0 0
      %1358 = vmatprep.subr.bf16.mxu0 0
      %1359 = vmatpush1.bf16.msra.mxu0 0
      %1360 = vmatprep.subr.bf16.mxu0 0
      %1361 = vmatpush1.bf16.msra.mxu0 0
      %1362 = vmatprep.subr.bf16.mxu0 0
      %1363 = vmatpush1.bf16.msra.mxu0 0
      %1364 = vmatprep.subr.bf16.mxu0 0
      %1365 = vmatpush1.bf16.msra.mxu0 0
      %1366 = vmatprep.subr.bf16.mxu0 0
      %1367 = vmatpush1.bf16.msra.mxu0 0
      %1368 = vmatprep.subr.bf16.mxu0 0
      %1369 = vmatpush1.bf16.msra.mxu0 0
      %1370 = vmatprep.subr.bf16.mxu0 0
      %1371 = vmatpush1.bf16.msra.mxu0 0
      %1372 = vmatprep.subr.bf16.mxu0 0
      %1373 = vmatpush1.bf16.msra.mxu0 0
      %1374 = vmatprep.mubr.bf16.mxu0 0
      %1375 = vmatmul.mubr.bf16.gmra.mrb[0].mxu0 %v1328
      %v1376 = vpop.f32.mrb[0].mxu0
      %v1377 = vadd.f32 %v1278, %v1376
      %v1378 = vpop.f32.mrb[0].mxu0
      %v1379 = vpop.f32.mrb[0].mxu0
      %v1380 = vadd.f32 %v1281, %v1379
      %v1381 = vpop.f32.mrb[0].mxu0
      %1382 = vmatprep.mubr.bf16.mxu0 0
      %1383 = vmatmul.mubr.bf16.gmra.mrb[0].mxu0 %v1331
      %v1384 = vpop.f32.mrb[0].mxu0
      %v1385 = vadd.f32 %v1286, %v1384
      %v1386 = vpop.f32.mrb[0].mxu0
      %v1387 = vpop.f32.mrb[0].mxu0
      %v1388 = vadd.f32 %v1289, %v1387
      %v1389 = vpop.f32.mrb[0].mxu0
      %1390 = vmatprep.mubr.bf16.mxu0 0
      %1391 = vmatmul.mubr.bf16.gmra.mrb[0].mxu0 %v1334
      %v1392 = vpop.f32.mrb[0].mxu0
      %v1393 = vadd.f32 %v1294, %v1392
      %v1394 = vpop.f32.mrb[0].mxu0
      %v1395 = vpop.f32.mrb[0].mxu0
      %v1396 = vadd.f32 %v1297, %v1395
      %v1397 = vpop.f32.mrb[0].mxu0
      %1398 = vmatprep.mubr.bf16.mxu0 0
      %1399 = vmatmul.mubr.bf16.gmra.mrb[0].mxu0 %v1337
      %v1400 = vpop.f32.mrb[0].mxu0
      %v1401 = vadd.f32 %v1302, %v1400
      %v1402 = vpop.f32.mrb[0].mxu0
      %v1403 = vpop.f32.mrb[0].mxu0
      %v1404 = vadd.f32 %v1305, %v1403
      %v1405 = vpop.f32.mrb[0].mxu0
      %1406 = vmatprep.mubr.bf16.mxu0 0
      %1407 = vmatmul.mubr.bf16.gmra.mrb[0].mxu0 %v1340
      %v1408 = vpop.f32.mrb[0].mxu0
      %v1409 = vadd.f32 %v1310, %v1408
      %v1410 = vpop.f32.mrb[0].mxu0
      %v1411 = vpop.f32.mrb[0].mxu0
      %v1412 = vpop.f32.mrb[0].mxu0
      %1413 = vdwg.mxu0
      %v1414 = vld [vmem:[%s9] sm:$0x1]
      %v1416 = vlaneseq
      %v1417 = vshrl.u32 %v1416, 7
      %v1418 = vsub.s32 0, %v1417
      %v1419 = vrot.slane %v1414, %v1418
      %v1421 = vadd.f32 %v1377, %v1419
      %v1422 = vadd.f32 %v1380, %v1419
      %v1423 = vadd.f32 %v1385, %v1419
      %v1424 = vadd.f32 %v1388, %v1419
      %v1425 = vadd.f32 %v1393, %v1419
      %v1426 = vadd.f32 %v1396, %v1419
      %v1427 = vadd.f32 %v1401, %v1419
      %v1428 = vadd.f32 %v1404, %v1419
      %v1429 = vadd.f32 %v1409, %v1419
      %v1430 = vmax.f32 %v1421, 0.0
      %v1431 = vmax.f32 %v1422, 0.0
      %v1432 = vmax.f32 %v1423, 0.0
      %v1433 = vmax.f32 %v1424, 0.0
      %v1434 = vmax.f32 %v1425, 0.0
      %v1435 = vmax.f32 %v1426, 0.0
      %v1436 = vmax.f32 %v1427, 0.0
      %v1437 = vmax.f32 %v1428, 0.0
      %v1438 = vmax.f32 %v1429, 0.0
      %v1439 = vpack.c.bf16 %v1431, %v1430
      %v1440 = vpack.c.bf16 %v1433, %v1432
      %v1441 = vpack.c.bf16 %v1435, %v1434
      %v1442 = vpack.c.bf16 %v1437, %v1436
      %v1443 = vpack.c.bf16 %v1438, %v1438
      %v1444 = vld [vmem:[%s10] sm:$0xf]
      %v1445 = vld [vmem:[%s10 + $0x4] sm:$0xf]
      %v1446 = vld [vmem:[%s10 + $0x8] sm:$0xf]
      %v1447 = vld [vmem:[%s10 + $0xc] sm:$0xf]
      %v1448 = vld [vmem:[%s11] sm:$0x1]
      %v1450 = vlaneseq
      %v1451 = vshrl.u32 %v1450, 7
      %v1452 = vsub.s32 0, %v1451
      %v1453 = vrot.slane %v1448, %v1452
      %v1459 = vunpack.c.l.b16 %v1444
      %v1460 = vunpack.c.l.b16 %v1445
      %v1461 = vunpack.c.l.b16 %v1446
      %v1462 = vunpack.c.l.b16 %v1447
      %v1463 = vpack.c.b16 %v1460, %v1459
      %v1464 = vpack.c.b16 %v1462, %v1461
      %v1468 = vsel %vm836, %v1439, 0
      %v1471 = vsel %vm836, %v1440, 0
      %v1474 = vsel %vm836, %v1441, 0
      %v1477 = vsel %vm836, %v1442, 0
      %v1480 = vsel %vm836, %v1443, 0
      %1482 = vmatprep.subr.bf16.mxu0 0
      %1483 = vmatpush1.bf16.msra.mxu0 %v1463
      %1484 = vmatprep.subr.bf16.mxu0 0
      %1485 = vmatpush1.bf16.msra.mxu0 %v1464
      %1486 = vmatprep.subr.bf16.mxu0 0
      %1487 = vmatpush1.bf16.msra.mxu0 0
      %1488 = vmatprep.subr.bf16.mxu0 0
      %1489 = vmatpush1.bf16.msra.mxu0 0
      %1490 = vmatprep.subr.bf16.mxu0 0
      %1491 = vmatpush1.bf16.msra.mxu0 0
      %1492 = vmatprep.subr.bf16.mxu0 0
      %1493 = vmatpush1.bf16.msra.mxu0 0
      %1494 = vmatprep.subr.bf16.mxu0 0
      %1495 = vmatpush1.bf16.msra.mxu0 0
      %1496 = vmatprep.subr.bf16.mxu0 0
      %1497 = vmatpush1.bf16.msra.mxu0 0
      %1498 = vmatprep.subr.bf16.mxu0 0
      %1499 = vmatpush1.bf16.msra.mxu0 0
      %1500 = vmatprep.subr.bf16.mxu0 0
      %1501 = vmatpush1.bf16.msra.mxu0 0
      %1502 = vmatprep.subr.bf16.mxu0 0
      %1503 = vmatpush1.bf16.msra.mxu0 0
      %1504 = vmatprep.subr.bf16.mxu0 0
      %1505 = vmatpush1.bf16.msra.mxu0 0
      %1506 = vmatprep.subr.bf16.mxu0 0
      %1507 = vmatpush1.bf16.msra.mxu0 0
      %1508 = vmatprep.subr.bf16.mxu0 0
      %1509 = vmatpush1.bf16.msra.mxu0 0
      %1510 = vmatprep.subr.bf16.mxu0 0
      %1511 = vmatpush1.bf16.msra.mxu0 0
      %1512 = vmatprep.subr.bf16.mxu0 0
      %1513 = vmatpush1.bf16.msra.mxu0 0
      %1514 = vmatprep.mubr.bf16.mxu0 0
      %1515 = vmatmul.mubr.bf16.gmra.mrb[0].mxu0 %v1468
      %v1516 = vpop.f32.mrb[0].mxu0
      %v1517 = vadd.f32 %v1453, %v1516
      %v1518 = vpop.f32.mrb[0].mxu0
      %v1519 = vpop.f32.mrb[0].mxu0
      %v1520 = vadd.f32 %v1453, %v1519
      %v1521 = vpop.f32.mrb[0].mxu0
      %1522 = vmatprep.mubr.bf16.mxu0 0
      %1523 = vmatmul.mubr.bf16.gmra.mrb[0].mxu0 %v1471
      %v1524 = vpop.f32.mrb[0].mxu0
      %v1525 = vadd.f32 %v1453, %v1524
      %v1526 = vpop.f32.mrb[0].mxu0
      %v1527 = vpop.f32.mrb[0].mxu0
      %v1528 = vadd.f32 %v1453, %v1527
      %v1529 = vpop.f32.mrb[0].mxu0
      %1530 = vmatprep.mubr.bf16.mxu0 0
      %1531 = vmatmul.mubr.bf16.gmra.mrb[0].mxu0 %v1474
      %v1532 = vpop.f32.mrb[0].mxu0
      %v1533 = vadd.f32 %v1453, %v1532
      %v1534 = vpop.f32.mrb[0].mxu0
      %v1535 = vpop.f32.mrb[0].mxu0
      %v1536 = vadd.f32 %v1453, %v1535
      %v1537 = vpop.f32.mrb[0].mxu0
      %1538 = vmatprep.mubr.bf16.mxu0 0
      %1539 = vmatmul.mubr.bf16.gmra.mrb[0].mxu0 %v1477
      %v1540 = vpop.f32.mrb[0].mxu0
      %v1541 = vadd.f32 %v1453, %v1540
      %v1542 = vpop.f32.mrb[0].mxu0
      %v1543 = vpop.f32.mrb[0].mxu0
      %v1544 = vadd.f32 %v1453, %v1543
      %v1545 = vpop.f32.mrb[0].mxu0
      %1546 = vmatprep.mubr.bf16.mxu0 0
      %1547 = vmatmul.mubr.bf16.gmra.mrb[0].mxu0 %v1480
      %v1548 = vpop.f32.mrb[0].mxu0
      %v1549 = vadd.f32 %v1453, %v1548
      %v1550 = vpop.f32.mrb[0].mxu0
      %v1551 = vpop.f32.mrb[0].mxu0
      %v1552 = vpop.f32.mrb[0].mxu0
      %1553 = vdwg.mxu0
      %v1554 = vmax.f32 %v1517, 0.0
      %v1555 = vmax.f32 %v1520, 0.0
      %v1556 = vmax.f32 %v1525, 0.0
      %v1557 = vmax.f32 %v1528, 0.0
      %v1558 = vmax.f32 %v1533, 0.0
      %v1559 = vmax.f32 %v1536, 0.0
      %v1560 = vmax.f32 %v1541, 0.0
      %v1561 = vmax.f32 %v1544, 0.0
      %v1562 = vmax.f32 %v1549, 0.0
      %v1563 = vld [vmem:[%s12] sm:$0x1]
      %v1565 = vlaneseq
      %v1566 = vshrl.u32 %v1565, 7
      %v1567 = vsub.s32 0, %v1566
      %v1568 = vrot.slane %v1563, %v1567
      %v1570 = vmul.f32 %v1554, %v1568
      %v1571 = vmul.f32 %v1555, %v1568
      %v1572 = vmul.f32 %v1556, %v1568
      %v1573 = vmul.f32 %v1557, %v1568
      %v1574 = vmul.f32 %v1558, %v1568
      %v1575 = vmul.f32 %v1559, %v1568
      %v1576 = vmul.f32 %v1560, %v1568
      %v1577 = vmul.f32 %v1561, %v1568
      %v1578 = vmul.f32 %v1562, %v1568
      %1588 = vrot.lane.b32.xlu0 %v1174, 64
      %v1589 = vpop.permute.xlu0 %1588
      %1590 = vrot.lane.b32.xlu0 %v1175, 64
      %v1591 = vpop.permute.xlu0 %1590
      %1592 = vrot.lane.b32.xlu0 %v1176, 64
      %v1593 = vpop.permute.xlu0 %1592
      %1594 = vrot.lane.b32.xlu0 %v1177, 64
      %v1595 = vpop.permute.xlu0 %1594
      %1596 = vrot.lane.b32.xlu0 %v1178, 64
      %v1597 = vpop.permute.xlu0 %1596
      %1598 = vrot.lane.b32.xlu0 %v1179, 64
      %v1599 = vpop.permute.xlu0 %1598
      %1600 = vrot.lane.b32.xlu0 %v1180, 64
      %v1601 = vpop.permute.xlu0 %1600
      %1602 = vrot.lane.b32.xlu0 %v1181, 64
      %v1603 = vpop.permute.xlu0 %1602
      %1604 = vrot.lane.b32.xlu0 %v1182, 64
      %v1605 = vpop.permute.xlu0 %1604
      %v1615 = vadd.f32 %v1570, %v1589
      %v1616 = vadd.f32 %v1571, %v1591
      %v1617 = vadd.f32 %v1572, %v1593
      %v1618 = vadd.f32 %v1573, %v1595
      %v1619 = vadd.f32 %v1574, %v1597
      %v1620 = vadd.f32 %v1575, %v1599
      %v1621 = vadd.f32 %v1576, %v1601
      %v1622 = vadd.f32 %v1577, %v1603
      %v1623 = vadd.f32 %v1578, %v1605
      %v1624 = vsel %vm836, %v1615, 0.0
      %1625 = vadd.xlane.f32.xlu0 %v1624
      %v1626 = vpop.xlane.xlu0 %1625
      %v1627 = vsel %vm836, %v1616, 0.0
      %1628 = vadd.xlane.f32.xlu0 %v1627
      %v1629 = vpop.xlane.xlu0 %1628
      %v1630 = vsel %vm836, %v1617, 0.0
      %1631 = vadd.xlane.f32.xlu0 %v1630
      %v1632 = vpop.xlane.xlu0 %1631
      %v1633 = vsel %vm836, %v1618, 0.0
      %1634 = vadd.xlane.f32.xlu0 %v1633
      %v1635 = vpop.xlane.xlu0 %1634
      %v1636 = vsel %vm836, %v1619, 0.0
      %1637 = vadd.xlane.f32.xlu0 %v1636
      %v1638 = vpop.xlane.xlu0 %1637
      %v1639 = vsel %vm836, %v1620, 0.0
      %1640 = vadd.xlane.f32.xlu0 %v1639
      %v1641 = vpop.xlane.xlu0 %1640
      %v1642 = vsel %vm836, %v1621, 0.0
      %1643 = vadd.xlane.f32.xlu0 %v1642
      %v1644 = vpop.xlane.xlu0 %1643
      %v1645 = vsel %vm836, %v1622, 0.0
      %1646 = vadd.xlane.f32.xlu0 %v1645
      %v1647 = vpop.xlane.xlu0 %1646
      %v1648 = vsel %vm836, %v1623, 0.0
      %1649 = vadd.xlane.f32.xlu0 %v1648
      %v1650 = vpop.xlane.xlu0 %1649
      %s1651 = sld [smem:[#allocation2]]
      %v1652 = vstv %s1651
      %v1653 = vadd.f32 %v1626, %v1652
      %v1654 = vadd.f32 %v1629, %v1652
      %v1655 = vadd.f32 %v1632, %v1652
      %v1656 = vadd.f32 %v1635, %v1652
      %v1657 = vadd.f32 %v1638, %v1652
      %v1658 = vadd.f32 %v1641, %v1652
      %v1659 = vadd.f32 %v1644, %v1652
      %v1660 = vadd.f32 %v1647, %v1652
      %v1661 = vadd.f32 %v1650, %v1652
      %vm1662 = vcmask 7168
      %1663 = vst.msk [vmem:[%s492] sm:$0xff] %vm1662, %v1653
      %1664 = vst.msk [vmem:[%s492 + $0x8] sm:$0xff] %vm1662, %v1654
      %1665 = vst.msk [vmem:[%s492 + $0x10] sm:$0xff] %vm1662, %v1655
      %1666 = vst.msk [vmem:[%s492 + $0x18] sm:$0xff] %vm1662, %v1656
      %1667 = vst.msk [vmem:[%s492 + $0x20] sm:$0xff] %vm1662, %v1657
      %1668 = vst.msk [vmem:[%s492 + $0x28] sm:$0xff] %vm1662, %v1658
      %1669 = vst.msk [vmem:[%s492 + $0x30] sm:$0xff] %vm1662, %v1659
      %1670 = vst.msk [vmem:[%s492 + $0x38] sm:$0xff] %vm1662, %v1660
      %1671 = vst.msk [vmem:[%s492 + $0x40] sm:$0xff] %vm1662, %v1661
      %s1672 = smul.u32 9, %s26
      %p1673 = scmp.lt.s32.totalorder %s1672, 17
      %s1674 = scalar_select %p1673, %s1672, 17
      %s1675 = smul.addr %s1674, 8
      %s1676 = scalar_lea.vmem %s14, %s1675
      // Predicated region
      $region77: #{link_predictor_forward.1} parent=75 // pred_check
        %p1677 = pneg %p348
      $region78: #{link_predictor_forward.1} parent=75 // pred_check_branch
        %1679 = sbr.rel (%p1677) target = $region80
      $region79: #{link_predictor_forward.1} parent=75 // pred_region
        %s1680 = smul.u32 9, %s26
      $region80: #{link_predictor_forward.1} parent=75 // pred_fallthru
        _
    $region76: #{link_predictor_forward.1} parent=5 // pred_fallthru
      _
    %p1681 = scmp.le.s32.totalorder 2, %s21
    // Predicated region
    $region81: #{link_predictor_forward.1} parent=5 // pred_check
      %p1682 = pneg %p1681
    $region82: #{link_predictor_forward.1} parent=5 // pred_check_branch
      %1684 = sbr.rel (%p1682) target = $region84
    $region83: #{link_predictor_forward.1} parent=5 // pred_region
      %s1685 = ssub.s32 %s21, 2
      // Predicated region
      $region85: #{link_predictor_forward.1} parent=83 // pred_check
        %p1686 = pneg %p354
      $region86: #{link_predictor_forward.1} parent=83 // pred_check_branch
        %1688 = sbr.rel (%p1686) target = $region88
      $region87: #{link_predictor_forward.1} parent=83 // pred_region
        %s1689 = smul.u32 9, %s27
        %p1690 = scmp.lt.s32.totalorder %s1689, 17
        %s1691 = scalar_select %p1690, %s1689, 17
        %s1692 = smul.addr %s1691, 8
        %s1693 = scalar_lea.vmem %s14, %s1692
      $region88: #{link_predictor_forward.1} parent=83 // pred_fallthru
        _
    $region84: #{link_predictor_forward.1} parent=5 // pred_fallthru
      _
  $region6: #{link_predictor_forward.1} parent=0 // loop_footer
    %s25 = sadd.s32 1, %s21
  $region7: #{link_predictor_forward.1} parent=0 // loop_footer_branch
    %20 = sbr.rel target = $region3
  $region8: #{link_predictor_forward.1} parent=0 // loop_exit
    _

</llo_original>
